<compile_context>
chip_gen: v7x
topology: tpu7x:2x2x1
jax: 0.10.0
libtpu: 0.0.40
codegen_flags: <defaults>
</compile_context>

<pallas_src>
import jax
import jax.numpy as jnp
from jax.experimental import pallas as pl
from jax.experimental.pallas import tpu as pltpu

# Small, synthetic sizes consistent with the module's forward signature.
B = 8          # batch
D_IN = 32      # input embedding dim (the `embedding` argument)
HID = 32       # GRU hidden size
EMB = 16       # token embedding size
VOCAB = 16     # vocabulary size
MAX_LEN = 6    # message length

GATES = 3 * HID        # 96
GATE_PAD = 128         # pad fused gate dim to a full lane row


def _sender_kernel(x_ref,                     # (B, D_IN)        f32 input embedding
                   we_ref, be_ref,            # (D_IN, HID) bf16, (1, HID) f32
                   sos_xi_ref,                # (1, GATE_PAD)    f32  sos@Wi + bi (padded)
                   temb_wi_ref,               # (VOCAB, GATE_PAD) bf16 temb@Wi + bi (padded)
                   wh3_ref, bh3_ref,          # (HID, GATE_PAD) bf16, (1, GATE_PAD) f32
                   wo_ref, bo_ref,            # (HID, VOCAB) bf16, (1, VOCAB) f32
                   gumbel_ref,                # (MAX_LEN, B, VOCAB) f32
                   msg_ref, lp_ref, whole_ref):
    # ---- hoist all weight / bias reads out of the recurrence --------------
    we = we_ref[...]
    be = be_ref[...]
    temb_wi = temb_wi_ref[...]
    wh3 = wh3_ref[...]
    bh3 = bh3_ref[...]
    wo = wo_ref[...]
    bo = bo_ref[...]

    # ---- encoder: embedding -> initial hidden state ------------------------
    h = jnp.tanh(
        jnp.dot(x_ref[...].astype(jnp.bfloat16), we,
                preferred_element_type=jnp.float32) + be)
    # input-gate pre-activations for the <sos> token (bias already folded in)
    xi = jnp.broadcast_to(sos_xi_ref[...], (B, GATE_PAD)).astype(jnp.float32)

    iota_v = jax.lax.broadcasted_iota(jnp.int32, (B, VOCAB), 1)

    toks, lps, wholes = [], [], []
    # MAX_LEN is a static constant -> fully unrolled recurrence.
    for t in range(MAX_LEN):
        # --- GRU cell (fused gates: one h @ Wh3 matmul) ---------------------
        gh = jnp.dot(h.astype(jnp.bfloat16), wh3,
                     preferred_element_type=jnp.float32) + bh3
        r = jax.nn.sigmoid(xi[:, 0 * HID:1 * HID] + gh[:, 0 * HID:1 * HID])
        z = jax.nn.sigmoid(xi[:, 1 * HID:2 * HID] + gh[:, 1 * HID:2 * HID])
        n = jnp.tanh(xi[:, 2 * HID:3 * HID] + r * gh[:, 2 * HID:3 * HID])
        h = (1.0 - z) * n + z * h

        # --- vocab projection ------------------------------------------------
        logits = jnp.dot(h.astype(jnp.bfloat16), wo,
                         preferred_element_type=jnp.float32) + bo

        # --- Categorical sample via Gumbel-max (argmax(logits+g) == argmax(logp+g))
        scores = logits + gumbel_ref[t]
        smax = jnp.max(scores, axis=-1, keepdims=True)
        tok = jnp.min(jnp.where(scores >= smax, iota_v, VOCAB),
                      axis=-1, keepdims=True)                    # (B, 1) int32
        onehot = (iota_v == tok).astype(jnp.float32)             # (B, VOCAB)

        # --- log-softmax + sampled-token log-prob (off the recurrence path) --
        lmax = jnp.max(logits, axis=-1, keepdims=True)
        shifted = logits - lmax
        logp = shifted - jnp.log(jnp.sum(jnp.exp(shifted), axis=-1, keepdims=True))
        lp_tok = jnp.sum(logp * onehot, axis=-1, keepdims=True)  # (B, 1)

        toks.append(tok)
        lps.append(lp_tok)
        wholes.append(logp)

        # --- next-step input pre-activations: one matmul replaces
        #     (onehot @ temb) and (x @ Wi_cat); input bias already folded in.
        if t + 1 < MAX_LEN:
            xi = jnp.dot(onehot.astype(jnp.bfloat16), temb_wi,
                         preferred_element_type=jnp.float32)

    # ---- single stores after the loop (no per-step masked stores) ----------
    msg_ref[...] = jnp.concatenate(toks, axis=-1)        # (B, MAX_LEN) int32
    lp_ref[...] = jnp.concatenate(lps, axis=-1)          # (B, MAX_LEN) f32
    whole_ref[...] = jnp.concatenate(wholes, axis=-1)    # (B, MAX_LEN*VOCAB) f32


def _build_pallas_fn():
    vmem = pl.BlockSpec(memory_space=pltpu.MemorySpace.VMEM)
    n_inputs = 10  # x, we, be, sos_xi, temb_wi, wh3, bh3, wo, bo, gumbel
    return pl.pallas_call(
        _sender_kernel,
        in_specs=[vmem] * n_inputs,
        out_specs=(vmem, vmem, vmem),
        out_shape=(
            jax.ShapeDtypeStruct((B, MAX_LEN), jnp.int32),           # messages
            jax.ShapeDtypeStruct((B, MAX_LEN), jnp.float32),         # log p(token)
            jax.ShapeDtypeStruct((B, MAX_LEN * VOCAB), jnp.float32)  # whole log-probs
        ),
    )


def init_params(key):
    ks = jax.random.split(key, 10)
    s = 0.1
    return dict(
        we=jax.random.normal(ks[0], (D_IN, HID), jnp.float32) * s,
        be=jnp.zeros((1, HID), jnp.float32),
        sos=jax.random.normal(ks[1], (1, EMB), jnp.float32) * s,
        temb=jax.random.normal(ks[2], (VOCAB, EMB), jnp.float32) * s,
        wir=jax.random.normal(ks[3], (EMB, HID), jnp.float32) * s,
        wiz=jax.random.normal(ks[4], (EMB, HID), jnp.float32) * s,
        win=jax.random.normal(ks[5], (EMB, HID), jnp.float32) * s,
        bir=jnp.zeros((1, HID), jnp.float32),
        biz=jnp.zeros((1, HID), jnp.float32),
        bin=jnp.zeros((1, HID), jnp.float32),
        whr=jax.random.normal(ks[6], (HID, HID), jnp.float32) * s,
        whz=jax.random.normal(ks[7], (HID, HID), jnp.float32) * s,
        whn=jax.random.normal(ks[8], (HID, HID), jnp.float32) * s,
        bhr=jnp.zeros((1, HID), jnp.float32),
        bhz=jnp.zeros((1, HID), jnp.float32),
        bhn=jnp.zeros((1, HID), jnp.float32),
        wo=jax.random.normal(ks[9], (HID, VOCAB), jnp.float32) * s,
        bo=jnp.zeros((1, VOCAB), jnp.float32),
    )


def _precompute_kernel_params(p):
    """One-time fusion / padding / bf16 cast of the raw GRU parameters."""
    wi_cat = jnp.concatenate([p["wir"], p["wiz"], p["win"]], axis=1)   # (EMB, 3H)
    bi_cat = jnp.concatenate([p["bir"], p["biz"], p["bin"]], axis=1)   # (1, 3H)
    wh_cat = jnp.concatenate([p["whr"], p["whz"], p["whn"]], axis=1)   # (HID, 3H)
    bh_cat = jnp.concatenate([p["bhr"], p["bhz"], p["bhn"]], axis=1)   # (1, 3H)

    # Fold token embedding + input bias into per-token gate pre-activations.
    temb_wi = p["temb"] @ wi_cat + bi_cat                              # (VOCAB, 3H)
    sos_xi = p["sos"] @ wi_cat + bi_cat                                # (1, 3H)

    pad = GATE_PAD - GATES
    padw = ((0, 0), (0, pad))
    return dict(
        we=p["we"].astype(jnp.bfloat16),
        be=p["be"].astype(jnp.float32),
        sos_xi=jnp.pad(sos_xi, padw).astype(jnp.float32),
        temb_wi=jnp.pad(temb_wi, padw).astype(jnp.bfloat16),
        wh3=jnp.pad(wh_cat, padw).astype(jnp.bfloat16),
        bh3=jnp.pad(bh_cat, padw).astype(jnp.float32),
        wo=p["wo"].astype(jnp.bfloat16),
        bo=p["bo"].astype(jnp.float32),
    )


class Sender:
    """Mirrors the PyTorch Sender: forward delegates to the message generator
    (here, the fused Pallas GRU message-generator kernel)."""

    def __init__(self, params):
        self.params = params
        self._kp = _precompute_kernel_params(params)   # fused weights, built once
        self._fn = jax.jit(_build_pallas_fn())

    def __call__(self, embedding, context=None, return_whole_log_probs=False,
                 rng=None):
        # Fresh Gumbel noise per call (exact Categorical sampling via Gumbel-max).
        if rng is None:
            rng = jax.random.PRNGKey(0)
        gumbel = jax.random.gumbel(rng, (MAX_LEN, B, VOCAB), jnp.float32)

        kp = self._kp
        msgs, lps, whole_flat = self._fn(
            embedding.astype(jnp.float32),
            kp["we"], kp["be"], kp["sos_xi"], kp["temb_wi"],
            kp["wh3"], kp["bh3"], kp["wo"], kp["bo"], gumbel)

        messages = msgs                                           # (B, T) int32
        log_probs = lps                                           # (B, T) f32
        if return_whole_log_probs:
            whole = whole_flat.reshape(B, MAX_LEN, VOCAB)         # (B, T, V) f32
            return messages, log_probs, whole
        return messages, log_probs

    # TODO(synk): get_log_prob_m_given_x (teacher-forced scoring of given
    # messages) is not part of forward(); not implemented here.


if __name__ == "__main__":
    key = jax.random.PRNGKey(0)
    pkey, xkey, skey = jax.random.split(key, 3)
    params = init_params(pkey)
    embedding = jax.random.normal(xkey, (B, D_IN), jnp.float32)

    sender = Sender(params)
    messages, log_probs, whole_log_probs = sender(
        embedding, return_whole_log_probs=True, rng=skey)
    jax.block_until_ready((messages, log_probs, whole_log_probs))

    assert messages.shape == (B, MAX_LEN) and messages.dtype == jnp.int32
    assert log_probs.shape == (B, MAX_LEN)
    assert whole_log_probs.shape == (B, MAX_LEN, VOCAB)
    # sanity: sampled tokens in range, whole log-probs normalize, per-token
    # log-prob matches the gathered whole log-prob.
    assert bool(jnp.all((messages >= 0) & (messages < VOCAB)))
    assert bool(jnp.allclose(jnp.sum(jnp.exp(whole_log_probs), axis=-1), 1.0,
                             atol=1e-3))
    gathered = jnp.take_along_axis(
        whole_log_probs, messages[..., None].astype(jnp.int32), axis=-1)[..., 0]
    assert bool(jnp.allclose(gathered, log_probs, atol=1e-5))
    print("KERNEL_OK")
</pallas_src>

<mosaic_0001>
module attributes {stable_mosaic.version = 11 : i64} {
  func.func @_sender_kernel(%arg0: memref<8x32xf32, #tpu.memory_space<vmem>>, %arg1: memref<32x32xbf16, #tpu.memory_space<vmem>>, %arg2: memref<1x32xf32, #tpu.memory_space<vmem>>, %arg3: memref<1x128xf32, #tpu.memory_space<vmem>>, %arg4: memref<16x128xbf16, #tpu.memory_space<vmem>>, %arg5: memref<32x128xbf16, #tpu.memory_space<vmem>>, %arg6: memref<1x128xf32, #tpu.memory_space<vmem>>, %arg7: memref<32x16xbf16, #tpu.memory_space<vmem>>, %arg8: memref<1x16xf32, #tpu.memory_space<vmem>>, %arg9: memref<6x8x16xf32, #tpu.memory_space<vmem>>, %arg10: memref<8x6xi32, #tpu.memory_space<vmem>>, %arg11: memref<8x6xf32, #tpu.memory_space<vmem>>, %arg12: memref<8x96xf32, #tpu.memory_space<vmem>>) attributes {dimension_semantics = [], scalar_prefetch = 0 : i64, scratch_operands = 0 : i64, tpu.core_type = #tpu.core_type<tc>} {
    %c0 = arith.constant 0 : index
    %c0_0 = arith.constant 0 : index
    %0 = vector.load %arg1[%c0, %c0_0] : memref<32x32xbf16, #tpu.memory_space<vmem>>, vector<32x32xbf16>
    %c0_1 = arith.constant 0 : index
    %c0_2 = arith.constant 0 : index
    %1 = vector.load %arg2[%c0_1, %c0_2] : memref<1x32xf32, #tpu.memory_space<vmem>>, vector<1x32xf32>
    %c0_3 = arith.constant 0 : index
    %c0_4 = arith.constant 0 : index
    %2 = vector.load %arg4[%c0_3, %c0_4] : memref<16x128xbf16, #tpu.memory_space<vmem>>, vector<16x128xbf16>
    %c0_5 = arith.constant 0 : index
    %c0_6 = arith.constant 0 : index
    %3 = vector.load %arg5[%c0_5, %c0_6] : memref<32x128xbf16, #tpu.memory_space<vmem>>, vector<32x128xbf16>
    %c0_7 = arith.constant 0 : index
    %c0_8 = arith.constant 0 : index
    %4 = vector.load %arg6[%c0_7, %c0_8] : memref<1x128xf32, #tpu.memory_space<vmem>>, vector<1x128xf32>
    %c0_9 = arith.constant 0 : index
    %c0_10 = arith.constant 0 : index
    %5 = vector.load %arg7[%c0_9, %c0_10] : memref<32x16xbf16, #tpu.memory_space<vmem>>, vector<32x16xbf16>
    %c0_11 = arith.constant 0 : index
    %c0_12 = arith.constant 0 : index
    %6 = vector.load %arg8[%c0_11, %c0_12] : memref<1x16xf32, #tpu.memory_space<vmem>>, vector<1x16xf32>
    %c0_13 = arith.constant 0 : index
    %c0_14 = arith.constant 0 : index
    %7 = vector.load %arg0[%c0_13, %c0_14] : memref<8x32xf32, #tpu.memory_space<vmem>>, vector<8x32xf32>
    %8 = arith.truncf %7 : vector<8x32xf32> to vector<8x32xbf16>
    %cst = arith.constant dense<0.000000e+00> : vector<8x32xf32>
    %9 = tpu.matmul %8, %0, %cst {dimension_numbers = #tpu.dot_dimension_numbers<[1], [0], [0], [1], [0, 0, 1, 1], [], []>} : vector<8x32xbf16>, vector<32x32xbf16>, vector<8x32xf32> -> vector<8x32xf32>
    %10 = vector.broadcast %1 : vector<1x32xf32> to vector<8x32xf32>
    %11 = arith.addf %9, %10 : vector<8x32xf32>
    %12 = math.tanh %11 : vector<8x32xf32>
    %c0_15 = arith.constant 0 : index
    %c0_16 = arith.constant 0 : index
    %13 = vector.load %arg3[%c0_15, %c0_16] : memref<1x128xf32, #tpu.memory_space<vmem>>, vector<1x128xf32>
    %14 = vector.shape_cast %13 : vector<1x128xf32> to vector<1x128xf32>
    %15 = vector.broadcast %14 : vector<1x128xf32> to vector<8x128xf32>
    %16 = tpu.iota {dimensions = array<i32: 1>} : vector<8x16xi32>
    %17 = arith.truncf %12 : vector<8x32xf32> to vector<8x32xbf16>
    %cst_17 = arith.constant dense<0.000000e+00> : vector<8x128xf32>
    %18 = tpu.matmul %17, %3, %cst_17 {dimension_numbers = #tpu.dot_dimension_numbers<[1], [0], [0], [1], [0, 0, 1, 1], [], []>} : vector<8x32xbf16>, vector<32x128xbf16>, vector<8x128xf32> -> vector<8x128xf32>
    %19 = vector.broadcast %4 : vector<1x128xf32> to vector<8x128xf32>
    %20 = arith.addf %18, %19 : vector<8x128xf32>
    %21 = vector.extract_strided_slice %15 {offsets = [0, 0], sizes = [8, 32], strides = [1, 1]} : vector<8x128xf32> to vector<8x32xf32>
    %22 = vector.extract_strided_slice %20 {offsets = [0, 0], sizes = [8, 32], strides = [1, 1]} : vector<8x128xf32> to vector<8x32xf32>
    %23 = arith.addf %21, %22 : vector<8x32xf32>
    %24 = arith.negf %23 : vector<8x32xf32>
    %25 = math.exp %24 : vector<8x32xf32>
    %cst_18 = arith.constant 1.000000e+00 : f32
    %26 = vector.broadcast %cst_18 : f32 to vector<8x32xf32>
    %27 = arith.addf %26, %25 : vector<8x32xf32>
    %28 = arith.divf %26, %27 : vector<8x32xf32>
    %29 = vector.extract_strided_slice %15 {offsets = [0, 32], sizes = [8, 32], strides = [1, 1]} : vector<8x128xf32> to vector<8x32xf32>
    %30 = vector.extract_strided_slice %20 {offsets = [0, 32], sizes = [8, 32], strides = [1, 1]} : vector<8x128xf32> to vector<8x32xf32>
    %31 = arith.addf %29, %30 : vector<8x32xf32>
    %32 = arith.negf %31 : vector<8x32xf32>
    %33 = math.exp %32 : vector<8x32xf32>
    %cst_19 = arith.constant 1.000000e+00 : f32
    %34 = vector.broadcast %cst_19 : f32 to vector<8x32xf32>
    %35 = arith.addf %34, %33 : vector<8x32xf32>
    %36 = arith.divf %34, %35 : vector<8x32xf32>
    %37 = vector.extract_strided_slice %15 {offsets = [0, 64], sizes = [8, 32], strides = [1, 1]} : vector<8x128xf32> to vector<8x32xf32>
    %38 = vector.extract_strided_slice %20 {offsets = [0, 64], sizes = [8, 32], strides = [1, 1]} : vector<8x128xf32> to vector<8x32xf32>
    %39 = arith.mulf %28, %38 : vector<8x32xf32>
    %40 = arith.addf %37, %39 : vector<8x32xf32>
    %41 = math.tanh %40 : vector<8x32xf32>
    %cst_20 = arith.constant 1.000000e+00 : f32
    %42 = vector.broadcast %cst_20 : f32 to vector<8x32xf32>
    %43 = arith.subf %42, %36 : vector<8x32xf32>
    %44 = arith.mulf %43, %41 : vector<8x32xf32>
    %45 = arith.mulf %36, %12 : vector<8x32xf32>
    %46 = arith.addf %44, %45 : vector<8x32xf32>
    %47 = arith.truncf %46 : vector<8x32xf32> to vector<8x32xbf16>
    %cst_21 = arith.constant dense<0.000000e+00> : vector<8x16xf32>
    %48 = tpu.matmul %47, %5, %cst_21 {dimension_numbers = #tpu.dot_dimension_numbers<[1], [0], [0], [1], [0, 0, 1, 1], [], []>} : vector<8x32xbf16>, vector<32x16xbf16>, vector<8x16xf32> -> vector<8x16xf32>
    %49 = vector.broadcast %6 : vector<1x16xf32> to vector<8x16xf32>
    %50 = arith.addf %48, %49 : vector<8x16xf32>
    %c0_22 = arith.constant 0 : index
    %c0_23 = arith.constant 0 : index
    %c0_24 = arith.constant 0 : index
    %51 = vector.load %arg9[%c0_22, %c0_23, %c0_24] : memref<6x8x16xf32, #tpu.memory_space<vmem>>, vector<1x8x16xf32>
    %52 = vector.shape_cast %51 : vector<1x8x16xf32> to vector<8x16xf32>
    %53 = arith.addf %50, %52 : vector<8x16xf32>
    %cst_25 = arith.constant dense<0xFF800000> : vector<8xf32>
    %54 = vector.multi_reduction <maximumf>, %53, %cst_25 [1] : vector<8x16xf32> to vector<8xf32>
    %55 = vector.shape_cast %54 : vector<8xf32> to vector<8x1xf32>
    %56 = vector.broadcast %55 : vector<8x1xf32> to vector<8x16xf32>
    %57 = arith.cmpf oge, %53, %56 : vector<8x16xf32>
    %c16_i32 = arith.constant 16 : i32
    %58 = vector.broadcast %c16_i32 : i32 to vector<8x16xi32>
    %59 = arith.select %57, %16, %58 : vector<8x16xi1>, vector<8x16xi32>
    %cst_26 = arith.constant dense<2147483647> : vector<8xi32>
    %60 = vector.multi_reduction <minsi>, %59, %cst_26 [1] : vector<8x16xi32> to vector<8xi32>
    %61 = vector.shape_cast %60 : vector<8xi32> to vector<8x1xi32>
    %62 = vector.broadcast %61 : vector<8x1xi32> to vector<8x16xi32>
    %63 = arith.cmpi eq, %16, %62 : vector<8x16xi32>
    %64 = arith.extui %63 : vector<8x16xi1> to vector<8x16xi32>
    %65 = arith.sitofp %64 : vector<8x16xi32> to vector<8x16xf32>
    %cst_27 = arith.constant dense<0xFF800000> : vector<8xf32>
    %66 = vector.multi_reduction <maximumf>, %50, %cst_27 [1] : vector<8x16xf32> to vector<8xf32>
    %67 = vector.shape_cast %66 : vector<8xf32> to vector<8x1xf32>
    %68 = vector.broadcast %67 : vector<8x1xf32> to vector<8x16xf32>
    %69 = arith.subf %50, %68 : vector<8x16xf32>
    %70 = math.exp %69 : vector<8x16xf32>
    %cst_28 = arith.constant dense<0.000000e+00> : vector<8xf32>
    %71 = vector.multi_reduction <add>, %70, %cst_28 [1] : vector<8x16xf32> to vector<8xf32>
    %72 = vector.shape_cast %71 : vector<8xf32> to vector<8x1xf32>
    %73 = math.log %72 : vector<8x1xf32>
    %74 = vector.broadcast %73 : vector<8x1xf32> to vector<8x16xf32>
    %75 = arith.subf %69, %74 : vector<8x16xf32>
    %76 = arith.mulf %75, %65 : vector<8x16xf32>
    %cst_29 = arith.constant dense<0.000000e+00> : vector<8xf32>
    %77 = vector.multi_reduction <add>, %76, %cst_29 [1] : vector<8x16xf32> to vector<8xf32>
    %78 = vector.shape_cast %77 : vector<8xf32> to vector<8x1xf32>
    %79 = arith.truncf %65 : vector<8x16xf32> to vector<8x16xbf16>
    %cst_30 = arith.constant dense<0.000000e+00> : vector<8x128xf32>
    %80 = tpu.matmul %79, %2, %cst_30 {dimension_numbers = #tpu.dot_dimension_numbers<[1], [0], [0], [1], [0, 0, 1, 1], [], []>} : vector<8x16xbf16>, vector<16x128xbf16>, vector<8x128xf32> -> vector<8x128xf32>
    %81 = arith.truncf %46 : vector<8x32xf32> to vector<8x32xbf16>
    %cst_31 = arith.constant dense<0.000000e+00> : vector<8x128xf32>
    %82 = tpu.matmul %81, %3, %cst_31 {dimension_numbers = #tpu.dot_dimension_numbers<[1], [0], [0], [1], [0, 0, 1, 1], [], []>} : vector<8x32xbf16>, vector<32x128xbf16>, vector<8x128xf32> -> vector<8x128xf32>
    %83 = vector.broadcast %4 : vector<1x128xf32> to vector<8x128xf32>
    %84 = arith.addf %82, %83 : vector<8x128xf32>
    %85 = vector.extract_strided_slice %80 {offsets = [0, 0], sizes = [8, 32], strides = [1, 1]} : vector<8x128xf32> to vector<8x32xf32>
    %86 = vector.extract_strided_slice %84 {offsets = [0, 0], sizes = [8, 32], strides = [1, 1]} : vector<8x128xf32> to vector<8x32xf32>
    %87 = arith.addf %85, %86 : vector<8x32xf32>
    %88 = arith.negf %87 : vector<8x32xf32>
    %89 = math.exp %88 : vector<8x32xf32>
    %cst_32 = arith.constant 1.000000e+00 : f32
    %90 = vector.broadcast %cst_32 : f32 to vector<8x32xf32>
    %91 = arith.addf %90, %89 : vector<8x32xf32>
    %92 = arith.divf %90, %91 : vector<8x32xf32>
    %93 = vector.extract_strided_slice %80 {offsets = [0, 32], sizes = [8, 32], strides = [1, 1]} : vector<8x128xf32> to vector<8x32xf32>
    %94 = vector.extract_strided_slice %84 {offsets = [0, 32], sizes = [8, 32], strides = [1, 1]} : vector<8x128xf32> to vector<8x32xf32>
    %95 = arith.addf %93, %94 : vector<8x32xf32>
    %96 = arith.negf %95 : vector<8x32xf32>
    %97 = math.exp %96 : vector<8x32xf32>
    %cst_33 = arith.constant 1.000000e+00 : f32
    %98 = vector.broadcast %cst_33 : f32 to vector<8x32xf32>
    %99 = arith.addf %98, %97 : vector<8x32xf32>
    %100 = arith.divf %98, %99 : vector<8x32xf32>
    %101 = vector.extract_strided_slice %80 {offsets = [0, 64], sizes = [8, 32], strides = [1, 1]} : vector<8x128xf32> to vector<8x32xf32>
    %102 = vector.extract_strided_slice %84 {offsets = [0, 64], sizes = [8, 32], strides = [1, 1]} : vector<8x128xf32> to vector<8x32xf32>
    %103 = arith.mulf %92, %102 : vector<8x32xf32>
    %104 = arith.addf %101, %103 : vector<8x32xf32>
    %105 = math.tanh %104 : vector<8x32xf32>
    %cst_34 = arith.constant 1.000000e+00 : f32
    %106 = vector.broadcast %cst_34 : f32 to vector<8x32xf32>
    %107 = arith.subf %106, %100 : vector<8x32xf32>
    %108 = arith.mulf %107, %105 : vector<8x32xf32>
    %109 = arith.mulf %100, %46 : vector<8x32xf32>
    %110 = arith.addf %108, %109 : vector<8x32xf32>
    %111 = arith.truncf %110 : vector<8x32xf32> to vector<8x32xbf16>
    %cst_35 = arith.constant dense<0.000000e+00> : vector<8x16xf32>
    %112 = tpu.matmul %111, %5, %cst_35 {dimension_numbers = #tpu.dot_dimension_numbers<[1], [0], [0], [1], [0, 0, 1, 1], [], []>} : vector<8x32xbf16>, vector<32x16xbf16>, vector<8x16xf32> -> vector<8x16xf32>
    %113 = vector.broadcast %6 : vector<1x16xf32> to vector<8x16xf32>
    %114 = arith.addf %112, %113 : vector<8x16xf32>
    %c1 = arith.constant 1 : index
    %c0_36 = arith.constant 0 : index
    %c0_37 = arith.constant 0 : index
    %115 = vector.load %arg9[%c1, %c0_36, %c0_37] : memref<6x8x16xf32, #tpu.memory_space<vmem>>, vector<1x8x16xf32>
    %116 = vector.shape_cast %115 : vector<1x8x16xf32> to vector<8x16xf32>
    %117 = arith.addf %114, %116 : vector<8x16xf32>
    %cst_38 = arith.constant dense<0xFF800000> : vector<8xf32>
    %118 = vector.multi_reduction <maximumf>, %117, %cst_38 [1] : vector<8x16xf32> to vector<8xf32>
    %119 = vector.shape_cast %118 : vector<8xf32> to vector<8x1xf32>
    %120 = vector.broadcast %119 : vector<8x1xf32> to vector<8x16xf32>
    %121 = arith.cmpf oge, %117, %120 : vector<8x16xf32>
    %c16_i32_39 = arith.constant 16 : i32
    %122 = vector.broadcast %c16_i32_39 : i32 to vector<8x16xi32>
    %123 = arith.select %121, %16, %122 : vector<8x16xi1>, vector<8x16xi32>
    %cst_40 = arith.constant dense<2147483647> : vector<8xi32>
    %124 = vector.multi_reduction <minsi>, %123, %cst_40 [1] : vector<8x16xi32> to vector<8xi32>
    %125 = vector.shape_cast %124 : vector<8xi32> to vector<8x1xi32>
    %126 = vector.broadcast %125 : vector<8x1xi32> to vector<8x16xi32>
    %127 = arith.cmpi eq, %16, %126 : vector<8x16xi32>
    %128 = arith.extui %127 : vector<8x16xi1> to vector<8x16xi32>
    %129 = arith.sitofp %128 : vector<8x16xi32> to vector<8x16xf32>
    %cst_41 = arith.constant dense<0xFF800000> : vector<8xf32>
    %130 = vector.multi_reduction <maximumf>, %114, %cst_41 [1] : vector<8x16xf32> to vector<8xf32>
    %131 = vector.shape_cast %130 : vector<8xf32> to vector<8x1xf32>
    %132 = vector.broadcast %131 : vector<8x1xf32> to vector<8x16xf32>
    %133 = arith.subf %114, %132 : vector<8x16xf32>
    %134 = math.exp %133 : vector<8x16xf32>
    %cst_42 = arith.constant dense<0.000000e+00> : vector<8xf32>
    %135 = vector.multi_reduction <add>, %134, %cst_42 [1] : vector<8x16xf32> to vector<8xf32>
    %136 = vector.shape_cast %135 : vector<8xf32> to vector<8x1xf32>
    %137 = math.log %136 : vector<8x1xf32>
    %138 = vector.broadcast %137 : vector<8x1xf32> to vector<8x16xf32>
    %139 = arith.subf %133, %138 : vector<8x16xf32>
    %140 = arith.mulf %139, %129 : vector<8x16xf32>
    %cst_43 = arith.constant dense<0.000000e+00> : vector<8xf32>
    %141 = vector.multi_reduction <add>, %140, %cst_43 [1] : vector<8x16xf32> to vector<8xf32>
    %142 = vector.shape_cast %141 : vector<8xf32> to vector<8x1xf32>
    %143 = arith.truncf %129 : vector<8x16xf32> to vector<8x16xbf16>
    %cst_44 = arith.constant dense<0.000000e+00> : vector<8x128xf32>
    %144 = tpu.matmul %143, %2, %cst_44 {dimension_numbers = #tpu.dot_dimension_numbers<[1], [0], [0], [1], [0, 0, 1, 1], [], []>} : vector<8x16xbf16>, vector<16x128xbf16>, vector<8x128xf32> -> vector<8x128xf32>
    %145 = arith.truncf %110 : vector<8x32xf32> to vector<8x32xbf16>
    %cst_45 = arith.constant dense<0.000000e+00> : vector<8x128xf32>
    %146 = tpu.matmul %145, %3, %cst_45 {dimension_numbers = #tpu.dot_dimension_numbers<[1], [0], [0], [1], [0, 0, 1, 1], [], []>} : vector<8x32xbf16>, vector<32x128xbf16>, vector<8x128xf32> -> vector<8x128xf32>
    %147 = vector.broadcast %4 : vector<1x128xf32> to vector<8x128xf32>
    %148 = arith.addf %146, %147 : vector<8x128xf32>
    %149 = vector.extract_strided_slice %144 {offsets = [0, 0], sizes = [8, 32], strides = [1, 1]} : vector<8x128xf32> to vector<8x32xf32>
    %150 = vector.extract_strided_slice %148 {offsets = [0, 0], sizes = [8, 32], strides = [1, 1]} : vector<8x128xf32> to vector<8x32xf32>
    %151 = arith.addf %149, %150 : vector<8x32xf32>
    %152 = arith.negf %151 : vector<8x32xf32>
    %153 = math.exp %152 : vector<8x32xf32>
    %cst_46 = arith.constant 1.000000e+00 : f32
    %154 = vector.broadcast %cst_46 : f32 to vector<8x32xf32>
    %155 = arith.addf %154, %153 : vector<8x32xf32>
    %156 = arith.divf %154, %155 : vector<8x32xf32>
    %157 = vector.extract_strided_slice %144 {offsets = [0, 32], sizes = [8, 32], strides = [1, 1]} : vector<8x128xf32> to vector<8x32xf32>
    %158 = vector.extract_strided_slice %148 {offsets = [0, 32], sizes = [8, 32], strides = [1, 1]} : vector<8x128xf32> to vector<8x32xf32>
    %159 = arith.addf %157, %158 : vector<8x32xf32>
    %160 = arith.negf %159 : vector<8x32xf32>
    %161 = math.exp %160 : vector<8x32xf32>
    %cst_47 = arith.constant 1.000000e+00 : f32
    %162 = vector.broadcast %cst_47 : f32 to vector<8x32xf32>
    %163 = arith.addf %162, %161 : vector<8x32xf32>
    %164 = arith.divf %162, %163 : vector<8x32xf32>
    %165 = vector.extract_strided_slice %144 {offsets = [0, 64], sizes = [8, 32], strides = [1, 1]} : vector<8x128xf32> to vector<8x32xf32>
    %166 = vector.extract_strided_slice %148 {offsets = [0, 64], sizes = [8, 32], strides = [1, 1]} : vector<8x128xf32> to vector<8x32xf32>
    %167 = arith.mulf %156, %166 : vector<8x32xf32>
    %168 = arith.addf %165, %167 : vector<8x32xf32>
    %169 = math.tanh %168 : vector<8x32xf32>
    %cst_48 = arith.constant 1.000000e+00 : f32
    %170 = vector.broadcast %cst_48 : f32 to vector<8x32xf32>
    %171 = arith.subf %170, %164 : vector<8x32xf32>
    %172 = arith.mulf %171, %169 : vector<8x32xf32>
    %173 = arith.mulf %164, %110 : vector<8x32xf32>
    %174 = arith.addf %172, %173 : vector<8x32xf32>
    %175 = arith.truncf %174 : vector<8x32xf32> to vector<8x32xbf16>
    %cst_49 = arith.constant dense<0.000000e+00> : vector<8x16xf32>
    %176 = tpu.matmul %175, %5, %cst_49 {dimension_numbers = #tpu.dot_dimension_numbers<[1], [0], [0], [1], [0, 0, 1, 1], [], []>} : vector<8x32xbf16>, vector<32x16xbf16>, vector<8x16xf32> -> vector<8x16xf32>
    %177 = vector.broadcast %6 : vector<1x16xf32> to vector<8x16xf32>
    %178 = arith.addf %176, %177 : vector<8x16xf32>
    %c2 = arith.constant 2 : index
    %c0_50 = arith.constant 0 : index
    %c0_51 = arith.constant 0 : index
    %179 = vector.load %arg9[%c2, %c0_50, %c0_51] : memref<6x8x16xf32, #tpu.memory_space<vmem>>, vector<1x8x16xf32>
    %180 = vector.shape_cast %179 : vector<1x8x16xf32> to vector<8x16xf32>
    %181 = arith.addf %178, %180 : vector<8x16xf32>
    %cst_52 = arith.constant dense<0xFF800000> : vector<8xf32>
    %182 = vector.multi_reduction <maximumf>, %181, %cst_52 [1] : vector<8x16xf32> to vector<8xf32>
    %183 = vector.shape_cast %182 : vector<8xf32> to vector<8x1xf32>
    %184 = vector.broadcast %183 : vector<8x1xf32> to vector<8x16xf32>
    %185 = arith.cmpf oge, %181, %184 : vector<8x16xf32>
    %c16_i32_53 = arith.constant 16 : i32
    %186 = vector.broadcast %c16_i32_53 : i32 to vector<8x16xi32>
    %187 = arith.select %185, %16, %186 : vector<8x16xi1>, vector<8x16xi32>
    %cst_54 = arith.constant dense<2147483647> : vector<8xi32>
    %188 = vector.multi_reduction <minsi>, %187, %cst_54 [1] : vector<8x16xi32> to vector<8xi32>
    %189 = vector.shape_cast %188 : vector<8xi32> to vector<8x1xi32>
    %190 = vector.broadcast %189 : vector<8x1xi32> to vector<8x16xi32>
    %191 = arith.cmpi eq, %16, %190 : vector<8x16xi32>
    %192 = arith.extui %191 : vector<8x16xi1> to vector<8x16xi32>
    %193 = arith.sitofp %192 : vector<8x16xi32> to vector<8x16xf32>
    %cst_55 = arith.constant dense<0xFF800000> : vector<8xf32>
    %194 = vector.multi_reduction <maximumf>, %178, %cst_55 [1] : vector<8x16xf32> to vector<8xf32>
    %195 = vector.shape_cast %194 : vector<8xf32> to vector<8x1xf32>
    %196 = vector.broadcast %195 : vector<8x1xf32> to vector<8x16xf32>
    %197 = arith.subf %178, %196 : vector<8x16xf32>
    %198 = math.exp %197 : vector<8x16xf32>
    %cst_56 = arith.constant dense<0.000000e+00> : vector<8xf32>
    %199 = vector.multi_reduction <add>, %198, %cst_56 [1] : vector<8x16xf32> to vector<8xf32>
    %200 = vector.shape_cast %199 : vector<8xf32> to vector<8x1xf32>
    %201 = math.log %200 : vector<8x1xf32>
    %202 = vector.broadcast %201 : vector<8x1xf32> to vector<8x16xf32>
    %203 = arith.subf %197, %202 : vector<8x16xf32>
    %204 = arith.mulf %203, %193 : vector<8x16xf32>
    %cst_57 = arith.constant dense<0.000000e+00> : vector<8xf32>
    %205 = vector.multi_reduction <add>, %204, %cst_57 [1] : vector<8x16xf32> to vector<8xf32>
    %206 = vector.shape_cast %205 : vector<8xf32> to vector<8x1xf32>
    %207 = arith.truncf %193 : vector<8x16xf32> to vector<8x16xbf16>
    %cst_58 = arith.constant dense<0.000000e+00> : vector<8x128xf32>
    %208 = tpu.matmul %207, %2, %cst_58 {dimension_numbers = #tpu.dot_dimension_numbers<[1], [0], [0], [1], [0, 0, 1, 1], [], []>} : vector<8x16xbf16>, vector<16x128xbf16>, vector<8x128xf32> -> vector<8x128xf32>
    %209 = arith.truncf %174 : vector<8x32xf32> to vector<8x32xbf16>
    %cst_59 = arith.constant dense<0.000000e+00> : vector<8x128xf32>
    %210 = tpu.matmul %209, %3, %cst_59 {dimension_numbers = #tpu.dot_dimension_numbers<[1], [0], [0], [1], [0, 0, 1, 1], [], []>} : vector<8x32xbf16>, vector<32x128xbf16>, vector<8x128xf32> -> vector<8x128xf32>
    %211 = vector.broadcast %4 : vector<1x128xf32> to vector<8x128xf32>
    %212 = arith.addf %210, %211 : vector<8x128xf32>
    %213 = vector.extract_strided_slice %208 {offsets = [0, 0], sizes = [8, 32], strides = [1, 1]} : vector<8x128xf32> to vector<8x32xf32>
    %214 = vector.extract_strided_slice %212 {offsets = [0, 0], sizes = [8, 32], strides = [1, 1]} : vector<8x128xf32> to vector<8x32xf32>
    %215 = arith.addf %213, %214 : vector<8x32xf32>
    %216 = arith.negf %215 : vector<8x32xf32>
    %217 = math.exp %216 : vector<8x32xf32>
    %cst_60 = arith.constant 1.000000e+00 : f32
    %218 = vector.broadcast %cst_60 : f32 to vector<8x32xf32>
    %219 = arith.addf %218, %217 : vector<8x32xf32>
    %220 = arith.divf %218, %219 : vector<8x32xf32>
    %221 = vector.extract_strided_slice %208 {offsets = [0, 32], sizes = [8, 32], strides = [1, 1]} : vector<8x128xf32> to vector<8x32xf32>
    %222 = vector.extract_strided_slice %212 {offsets = [0, 32], sizes = [8, 32], strides = [1, 1]} : vector<8x128xf32> to vector<8x32xf32>
    %223 = arith.addf %221, %222 : vector<8x32xf32>
    %224 = arith.negf %223 : vector<8x32xf32>
    %225 = math.exp %224 : vector<8x32xf32>
    %cst_61 = arith.constant 1.000000e+00 : f32
    %226 = vector.broadcast %cst_61 : f32 to vector<8x32xf32>
    %227 = arith.addf %226, %225 : vector<8x32xf32>
    %228 = arith.divf %226, %227 : vector<8x32xf32>
    %229 = vector.extract_strided_slice %208 {offsets = [0, 64], sizes = [8, 32], strides = [1, 1]} : vector<8x128xf32> to vector<8x32xf32>
    %230 = vector.extract_strided_slice %212 {offsets = [0, 64], sizes = [8, 32], strides = [1, 1]} : vector<8x128xf32> to vector<8x32xf32>
    %231 = arith.mulf %220, %230 : vector<8x32xf32>
    %232 = arith.addf %229, %231 : vector<8x32xf32>
    %233 = math.tanh %232 : vector<8x32xf32>
    %cst_62 = arith.constant 1.000000e+00 : f32
    %234 = vector.broadcast %cst_62 : f32 to vector<8x32xf32>
    %235 = arith.subf %234, %228 : vector<8x32xf32>
    %236 = arith.mulf %235, %233 : vector<8x32xf32>
    %237 = arith.mulf %228, %174 : vector<8x32xf32>
    %238 = arith.addf %236, %237 : vector<8x32xf32>
    %239 = arith.truncf %238 : vector<8x32xf32> to vector<8x32xbf16>
    %cst_63 = arith.constant dense<0.000000e+00> : vector<8x16xf32>
    %240 = tpu.matmul %239, %5, %cst_63 {dimension_numbers = #tpu.dot_dimension_numbers<[1], [0], [0], [1], [0, 0, 1, 1], [], []>} : vector<8x32xbf16>, vector<32x16xbf16>, vector<8x16xf32> -> vector<8x16xf32>
    %241 = vector.broadcast %6 : vector<1x16xf32> to vector<8x16xf32>
    %242 = arith.addf %240, %241 : vector<8x16xf32>
    %c3 = arith.constant 3 : index
    %c0_64 = arith.constant 0 : index
    %c0_65 = arith.constant 0 : index
    %243 = vector.load %arg9[%c3, %c0_64, %c0_65] : memref<6x8x16xf32, #tpu.memory_space<vmem>>, vector<1x8x16xf32>
    %244 = vector.shape_cast %243 : vector<1x8x16xf32> to vector<8x16xf32>
    %245 = arith.addf %242, %244 : vector<8x16xf32>
    %cst_66 = arith.constant dense<0xFF800000> : vector<8xf32>
    %246 = vector.multi_reduction <maximumf>, %245, %cst_66 [1] : vector<8x16xf32> to vector<8xf32>
    %247 = vector.shape_cast %246 : vector<8xf32> to vector<8x1xf32>
    %248 = vector.broadcast %247 : vector<8x1xf32> to vector<8x16xf32>
    %249 = arith.cmpf oge, %245, %248 : vector<8x16xf32>
    %c16_i32_67 = arith.constant 16 : i32
    %250 = vector.broadcast %c16_i32_67 : i32 to vector<8x16xi32>
    %251 = arith.select %249, %16, %250 : vector<8x16xi1>, vector<8x16xi32>
    %cst_68 = arith.constant dense<2147483647> : vector<8xi32>
    %252 = vector.multi_reduction <minsi>, %251, %cst_68 [1] : vector<8x16xi32> to vector<8xi32>
    %253 = vector.shape_cast %252 : vector<8xi32> to vector<8x1xi32>
    %254 = vector.broadcast %253 : vector<8x1xi32> to vector<8x16xi32>
    %255 = arith.cmpi eq, %16, %254 : vector<8x16xi32>
    %256 = arith.extui %255 : vector<8x16xi1> to vector<8x16xi32>
    %257 = arith.sitofp %256 : vector<8x16xi32> to vector<8x16xf32>
    %cst_69 = arith.constant dense<0xFF800000> : vector<8xf32>
    %258 = vector.multi_reduction <maximumf>, %242, %cst_69 [1] : vector<8x16xf32> to vector<8xf32>
    %259 = vector.shape_cast %258 : vector<8xf32> to vector<8x1xf32>
    %260 = vector.broadcast %259 : vector<8x1xf32> to vector<8x16xf32>
    %261 = arith.subf %242, %260 : vector<8x16xf32>
    %262 = math.exp %261 : vector<8x16xf32>
    %cst_70 = arith.constant dense<0.000000e+00> : vector<8xf32>
    %263 = vector.multi_reduction <add>, %262, %cst_70 [1] : vector<8x16xf32> to vector<8xf32>
    %264 = vector.shape_cast %263 : vector<8xf32> to vector<8x1xf32>
    %265 = math.log %264 : vector<8x1xf32>
    %266 = vector.broadcast %265 : vector<8x1xf32> to vector<8x16xf32>
    %267 = arith.subf %261, %266 : vector<8x16xf32>
    %268 = arith.mulf %267, %257 : vector<8x16xf32>
    %cst_71 = arith.constant dense<0.000000e+00> : vector<8xf32>
    %269 = vector.multi_reduction <add>, %268, %cst_71 [1] : vector<8x16xf32> to vector<8xf32>
    %270 = vector.shape_cast %269 : vector<8xf32> to vector<8x1xf32>
    %271 = arith.truncf %257 : vector<8x16xf32> to vector<8x16xbf16>
    %cst_72 = arith.constant dense<0.000000e+00> : vector<8x128xf32>
    %272 = tpu.matmul %271, %2, %cst_72 {dimension_numbers = #tpu.dot_dimension_numbers<[1], [0], [0], [1], [0, 0, 1, 1], [], []>} : vector<8x16xbf16>, vector<16x128xbf16>, vector<8x128xf32> -> vector<8x128xf32>
    %273 = arith.truncf %238 : vector<8x32xf32> to vector<8x32xbf16>
    %cst_73 = arith.constant dense<0.000000e+00> : vector<8x128xf32>
    %274 = tpu.matmul %273, %3, %cst_73 {dimension_numbers = #tpu.dot_dimension_numbers<[1], [0], [0], [1], [0, 0, 1, 1], [], []>} : vector<8x32xbf16>, vector<32x128xbf16>, vector<8x128xf32> -> vector<8x128xf32>
    %275 = vector.broadcast %4 : vector<1x128xf32> to vector<8x128xf32>
    %276 = arith.addf %274, %275 : vector<8x128xf32>
    %277 = vector.extract_strided_slice %272 {offsets = [0, 0], sizes = [8, 32], strides = [1, 1]} : vector<8x128xf32> to vector<8x32xf32>
    %278 = vector.extract_strided_slice %276 {offsets = [0, 0], sizes = [8, 32], strides = [1, 1]} : vector<8x128xf32> to vector<8x32xf32>
    %279 = arith.addf %277, %278 : vector<8x32xf32>
    %280 = arith.negf %279 : vector<8x32xf32>
    %281 = math.exp %280 : vector<8x32xf32>
    %cst_74 = arith.constant 1.000000e+00 : f32
    %282 = vector.broadcast %cst_74 : f32 to vector<8x32xf32>
    %283 = arith.addf %282, %281 : vector<8x32xf32>
    %284 = arith.divf %282, %283 : vector<8x32xf32>
    %285 = vector.extract_strided_slice %272 {offsets = [0, 32], sizes = [8, 32], strides = [1, 1]} : vector<8x128xf32> to vector<8x32xf32>
    %286 = vector.extract_strided_slice %276 {offsets = [0, 32], sizes = [8, 32], strides = [1, 1]} : vector<8x128xf32> to vector<8x32xf32>
    %287 = arith.addf %285, %286 : vector<8x32xf32>
    %288 = arith.negf %287 : vector<8x32xf32>
    %289 = math.exp %288 : vector<8x32xf32>
    %cst_75 = arith.constant 1.000000e+00 : f32
    %290 = vector.broadcast %cst_75 : f32 to vector<8x32xf32>
    %291 = arith.addf %290, %289 : vector<8x32xf32>
    %292 = arith.divf %290, %291 : vector<8x32xf32>
    %293 = vector.extract_strided_slice %272 {offsets = [0, 64], sizes = [8, 32], strides = [1, 1]} : vector<8x128xf32> to vector<8x32xf32>
    %294 = vector.extract_strided_slice %276 {offsets = [0, 64], sizes = [8, 32], strides = [1, 1]} : vector<8x128xf32> to vector<8x32xf32>
    %295 = arith.mulf %284, %294 : vector<8x32xf32>
    %296 = arith.addf %293, %295 : vector<8x32xf32>
    %297 = math.tanh %296 : vector<8x32xf32>
    %cst_76 = arith.constant 1.000000e+00 : f32
    %298 = vector.broadcast %cst_76 : f32 to vector<8x32xf32>
    %299 = arith.subf %298, %292 : vector<8x32xf32>
    %300 = arith.mulf %299, %297 : vector<8x32xf32>
    %301 = arith.mulf %292, %238 : vector<8x32xf32>
    %302 = arith.addf %300, %301 : vector<8x32xf32>
    %303 = arith.truncf %302 : vector<8x32xf32> to vector<8x32xbf16>
    %cst_77 = arith.constant dense<0.000000e+00> : vector<8x16xf32>
    %304 = tpu.matmul %303, %5, %cst_77 {dimension_numbers = #tpu.dot_dimension_numbers<[1], [0], [0], [1], [0, 0, 1, 1], [], []>} : vector<8x32xbf16>, vector<32x16xbf16>, vector<8x16xf32> -> vector<8x16xf32>
    %305 = vector.broadcast %6 : vector<1x16xf32> to vector<8x16xf32>
    %306 = arith.addf %304, %305 : vector<8x16xf32>
    %c4 = arith.constant 4 : index
    %c0_78 = arith.constant 0 : index
    %c0_79 = arith.constant 0 : index
    %307 = vector.load %arg9[%c4, %c0_78, %c0_79] : memref<6x8x16xf32, #tpu.memory_space<vmem>>, vector<1x8x16xf32>
    %308 = vector.shape_cast %307 : vector<1x8x16xf32> to vector<8x16xf32>
    %309 = arith.addf %306, %308 : vector<8x16xf32>
    %cst_80 = arith.constant dense<0xFF800000> : vector<8xf32>
    %310 = vector.multi_reduction <maximumf>, %309, %cst_80 [1] : vector<8x16xf32> to vector<8xf32>
    %311 = vector.shape_cast %310 : vector<8xf32> to vector<8x1xf32>
    %312 = vector.broadcast %311 : vector<8x1xf32> to vector<8x16xf32>
    %313 = arith.cmpf oge, %309, %312 : vector<8x16xf32>
    %c16_i32_81 = arith.constant 16 : i32
    %314 = vector.broadcast %c16_i32_81 : i32 to vector<8x16xi32>
    %315 = arith.select %313, %16, %314 : vector<8x16xi1>, vector<8x16xi32>
    %cst_82 = arith.constant dense<2147483647> : vector<8xi32>
    %316 = vector.multi_reduction <minsi>, %315, %cst_82 [1] : vector<8x16xi32> to vector<8xi32>
    %317 = vector.shape_cast %316 : vector<8xi32> to vector<8x1xi32>
    %318 = vector.broadcast %317 : vector<8x1xi32> to vector<8x16xi32>
    %319 = arith.cmpi eq, %16, %318 : vector<8x16xi32>
    %320 = arith.extui %319 : vector<8x16xi1> to vector<8x16xi32>
    %321 = arith.sitofp %320 : vector<8x16xi32> to vector<8x16xf32>
    %cst_83 = arith.constant dense<0xFF800000> : vector<8xf32>
    %322 = vector.multi_reduction <maximumf>, %306, %cst_83 [1] : vector<8x16xf32> to vector<8xf32>
    %323 = vector.shape_cast %322 : vector<8xf32> to vector<8x1xf32>
    %324 = vector.broadcast %323 : vector<8x1xf32> to vector<8x16xf32>
    %325 = arith.subf %306, %324 : vector<8x16xf32>
    %326 = math.exp %325 : vector<8x16xf32>
    %cst_84 = arith.constant dense<0.000000e+00> : vector<8xf32>
    %327 = vector.multi_reduction <add>, %326, %cst_84 [1] : vector<8x16xf32> to vector<8xf32>
    %328 = vector.shape_cast %327 : vector<8xf32> to vector<8x1xf32>
    %329 = math.log %328 : vector<8x1xf32>
    %330 = vector.broadcast %329 : vector<8x1xf32> to vector<8x16xf32>
    %331 = arith.subf %325, %330 : vector<8x16xf32>
    %332 = arith.mulf %331, %321 : vector<8x16xf32>
    %cst_85 = arith.constant dense<0.000000e+00> : vector<8xf32>
    %333 = vector.multi_reduction <add>, %332, %cst_85 [1] : vector<8x16xf32> to vector<8xf32>
    %334 = vector.shape_cast %333 : vector<8xf32> to vector<8x1xf32>
    %335 = arith.truncf %321 : vector<8x16xf32> to vector<8x16xbf16>
    %cst_86 = arith.constant dense<0.000000e+00> : vector<8x128xf32>
    %336 = tpu.matmul %335, %2, %cst_86 {dimension_numbers = #tpu.dot_dimension_numbers<[1], [0], [0], [1], [0, 0, 1, 1], [], []>} : vector<8x16xbf16>, vector<16x128xbf16>, vector<8x128xf32> -> vector<8x128xf32>
    %337 = arith.truncf %302 : vector<8x32xf32> to vector<8x32xbf16>
    %cst_87 = arith.constant dense<0.000000e+00> : vector<8x128xf32>
    %338 = tpu.matmul %337, %3, %cst_87 {dimension_numbers = #tpu.dot_dimension_numbers<[1], [0], [0], [1], [0, 0, 1, 1], [], []>} : vector<8x32xbf16>, vector<32x128xbf16>, vector<8x128xf32> -> vector<8x128xf32>
    %339 = vector.broadcast %4 : vector<1x128xf32> to vector<8x128xf32>
    %340 = arith.addf %338, %339 : vector<8x128xf32>
    %341 = vector.extract_strided_slice %336 {offsets = [0, 0], sizes = [8, 32], strides = [1, 1]} : vector<8x128xf32> to vector<8x32xf32>
    %342 = vector.extract_strided_slice %340 {offsets = [0, 0], sizes = [8, 32], strides = [1, 1]} : vector<8x128xf32> to vector<8x32xf32>
    %343 = arith.addf %341, %342 : vector<8x32xf32>
    %344 = arith.negf %343 : vector<8x32xf32>
    %345 = math.exp %344 : vector<8x32xf32>
    %cst_88 = arith.constant 1.000000e+00 : f32
    %346 = vector.broadcast %cst_88 : f32 to vector<8x32xf32>
    %347 = arith.addf %346, %345 : vector<8x32xf32>
    %348 = arith.divf %346, %347 : vector<8x32xf32>
    %349 = vector.extract_strided_slice %336 {offsets = [0, 32], sizes = [8, 32], strides = [1, 1]} : vector<8x128xf32> to vector<8x32xf32>
    %350 = vector.extract_strided_slice %340 {offsets = [0, 32], sizes = [8, 32], strides = [1, 1]} : vector<8x128xf32> to vector<8x32xf32>
    %351 = arith.addf %349, %350 : vector<8x32xf32>
    %352 = arith.negf %351 : vector<8x32xf32>
    %353 = math.exp %352 : vector<8x32xf32>
    %cst_89 = arith.constant 1.000000e+00 : f32
    %354 = vector.broadcast %cst_89 : f32 to vector<8x32xf32>
    %355 = arith.addf %354, %353 : vector<8x32xf32>
    %356 = arith.divf %354, %355 : vector<8x32xf32>
    %357 = vector.extract_strided_slice %336 {offsets = [0, 64], sizes = [8, 32], strides = [1, 1]} : vector<8x128xf32> to vector<8x32xf32>
    %358 = vector.extract_strided_slice %340 {offsets = [0, 64], sizes = [8, 32], strides = [1, 1]} : vector<8x128xf32> to vector<8x32xf32>
    %359 = arith.mulf %348, %358 : vector<8x32xf32>
    %360 = arith.addf %357, %359 : vector<8x32xf32>
    %361 = math.tanh %360 : vector<8x32xf32>
    %cst_90 = arith.constant 1.000000e+00 : f32
    %362 = vector.broadcast %cst_90 : f32 to vector<8x32xf32>
    %363 = arith.subf %362, %356 : vector<8x32xf32>
    %364 = arith.mulf %363, %361 : vector<8x32xf32>
    %365 = arith.mulf %356, %302 : vector<8x32xf32>
    %366 = arith.addf %364, %365 : vector<8x32xf32>
    %367 = arith.truncf %366 : vector<8x32xf32> to vector<8x32xbf16>
    %cst_91 = arith.constant dense<0.000000e+00> : vector<8x16xf32>
    %368 = tpu.matmul %367, %5, %cst_91 {dimension_numbers = #tpu.dot_dimension_numbers<[1], [0], [0], [1], [0, 0, 1, 1], [], []>} : vector<8x32xbf16>, vector<32x16xbf16>, vector<8x16xf32> -> vector<8x16xf32>
    %369 = vector.broadcast %6 : vector<1x16xf32> to vector<8x16xf32>
    %370 = arith.addf %368, %369 : vector<8x16xf32>
    %c5 = arith.constant 5 : index
    %c0_92 = arith.constant 0 : index
    %c0_93 = arith.constant 0 : index
    %371 = vector.load %arg9[%c5, %c0_92, %c0_93] : memref<6x8x16xf32, #tpu.memory_space<vmem>>, vector<1x8x16xf32>
    %372 = vector.shape_cast %371 : vector<1x8x16xf32> to vector<8x16xf32>
    %373 = arith.addf %370, %372 : vector<8x16xf32>
    %cst_94 = arith.constant dense<0xFF800000> : vector<8xf32>
    %374 = vector.multi_reduction <maximumf>, %373, %cst_94 [1] : vector<8x16xf32> to vector<8xf32>
    %375 = vector.shape_cast %374 : vector<8xf32> to vector<8x1xf32>
    %376 = vector.broadcast %375 : vector<8x1xf32> to vector<8x16xf32>
    %377 = arith.cmpf oge, %373, %376 : vector<8x16xf32>
    %c16_i32_95 = arith.constant 16 : i32
    %378 = vector.broadcast %c16_i32_95 : i32 to vector<8x16xi32>
    %379 = arith.select %377, %16, %378 : vector<8x16xi1>, vector<8x16xi32>
    %cst_96 = arith.constant dense<2147483647> : vector<8xi32>
    %380 = vector.multi_reduction <minsi>, %379, %cst_96 [1] : vector<8x16xi32> to vector<8xi32>
    %381 = vector.shape_cast %380 : vector<8xi32> to vector<8x1xi32>
    %382 = vector.broadcast %381 : vector<8x1xi32> to vector<8x16xi32>
    %383 = arith.cmpi eq, %16, %382 : vector<8x16xi32>
    %384 = arith.extui %383 : vector<8x16xi1> to vector<8x16xi32>
    %385 = arith.sitofp %384 : vector<8x16xi32> to vector<8x16xf32>
    %cst_97 = arith.constant dense<0xFF800000> : vector<8xf32>
    %386 = vector.multi_reduction <maximumf>, %370, %cst_97 [1] : vector<8x16xf32> to vector<8xf32>
    %387 = vector.shape_cast %386 : vector<8xf32> to vector<8x1xf32>
    %388 = vector.broadcast %387 : vector<8x1xf32> to vector<8x16xf32>
    %389 = arith.subf %370, %388 : vector<8x16xf32>
    %390 = math.exp %389 : vector<8x16xf32>
    %cst_98 = arith.constant dense<0.000000e+00> : vector<8xf32>
    %391 = vector.multi_reduction <add>, %390, %cst_98 [1] : vector<8x16xf32> to vector<8xf32>
    %392 = vector.shape_cast %391 : vector<8xf32> to vector<8x1xf32>
    %393 = math.log %392 : vector<8x1xf32>
    %394 = vector.broadcast %393 : vector<8x1xf32> to vector<8x16xf32>
    %395 = arith.subf %389, %394 : vector<8x16xf32>
    %396 = arith.mulf %395, %385 : vector<8x16xf32>
    %cst_99 = arith.constant dense<0.000000e+00> : vector<8xf32>
    %397 = vector.multi_reduction <add>, %396, %cst_99 [1] : vector<8x16xf32> to vector<8xf32>
    %398 = vector.shape_cast %397 : vector<8xf32> to vector<8x1xf32>
    %399 = tpu.concatenate %61, %125, %189, %253, %317, %381 in 1 : vector<8x1xi32>, vector<8x1xi32>, vector<8x1xi32>, vector<8x1xi32>, vector<8x1xi32>, vector<8x1xi32> -> vector<8x6xi32>
    %c0_100 = arith.constant 0 : index
    %c0_101 = arith.constant 0 : index
    %400 = vector.load %arg10[%c0_100, %c0_101] : memref<8x6xi32, #tpu.memory_space<vmem>>, vector<8x6xi32>
    tpu.vector_store %arg10[%c0_100, %c0_101], %399 {strides = array<i32>} : memref<8x6xi32, #tpu.memory_space<vmem>>, vector<8x6xi32>,
    %401 = tpu.concatenate %78, %142, %206, %270, %334, %398 in 1 : vector<8x1xf32>, vector<8x1xf32>, vector<8x1xf32>, vector<8x1xf32>, vector<8x1xf32>, vector<8x1xf32> -> vector<8x6xf32>
    %c0_102 = arith.constant 0 : index
    %c0_103 = arith.constant 0 : index
    %402 = vector.load %arg11[%c0_102, %c0_103] : memref<8x6xf32, #tpu.memory_space<vmem>>, vector<8x6xf32>
    tpu.vector_store %arg11[%c0_102, %c0_103], %401 {strides = array<i32>} : memref<8x6xf32, #tpu.memory_space<vmem>>, vector<8x6xf32>,
    %403 = tpu.concatenate %75, %139, %203, %267, %331, %395 in 1 : vector<8x16xf32>, vector<8x16xf32>, vector<8x16xf32>, vector<8x16xf32>, vector<8x16xf32>, vector<8x16xf32> -> vector<8x96xf32>
    %c0_104 = arith.constant 0 : index
    %c0_105 = arith.constant 0 : index
    %404 = vector.load %arg12[%c0_104, %c0_105] : memref<8x96xf32, #tpu.memory_space<vmem>>, vector<8x96xf32>
    tpu.vector_store %arg12[%c0_104, %c0_105], %403 {strides = array<i32>} : memref<8x96xf32, #tpu.memory_space<vmem>>, vector<8x96xf32>,
    return
  }
}

</mosaic_0001>

<llo_original>
// kernel: tpu_custom_call.1
$region0: #{tpu_custom_call.1}
  #allocation0 [shape = 'u32[]', space=smem, size = 0x4, offset = 0x4, fixed_abs, tag = 'smem constant byte address 0x4 - core index']
  #allocation1 [shape = 'u32[144,128]{1,0:T(1,128)}', space=vmem, size = 0x12000, scoped, tag = 'internal scratch']
  %s0 = inlined_call_operand.vmem [shape: f32[8,32], index: 0, kind: input, shape index: {}]
  %s1 = inlined_call_operand.hbm [shape: bf16[32,32], index: 1, kind: input, shape index: {}]
  %s2 = inlined_call_operand.vmem [shape: f32[1,32], index: 2, kind: input, shape index: {}]
  %s3 = inlined_call_operand.vmem [shape: f32[1,128], index: 3, kind: input, shape index: {}]
  %s4 = inlined_call_operand.hbm [shape: bf16[16,128], index: 4, kind: input, shape index: {}]
  %s5 = inlined_call_operand.hbm [shape: bf16[32,128], index: 5, kind: input, shape index: {}]
  %s6 = inlined_call_operand.hbm [shape: f32[1,128], index: 6, kind: input, shape index: {}]
  %s7 = inlined_call_operand.vmem [shape: bf16[32,16], index: 7, kind: input, shape index: {}]
  %s8 = inlined_call_operand.hbm [shape: f32[1,16], index: 8, kind: input, shape index: {}]
  %s9 = inlined_call_operand.vmem [shape: f32[6,8,16], index: 9, kind: input, shape index: {}]
  %s10 = inlined_call_operand.hbm [shape: s32[8,6], index: 10, kind: output, shape index: {0}]
  %s11 = inlined_call_operand.hbm [shape: f32[8,6], index: 11, kind: output, shape index: {1}]
  %s12 = inlined_call_operand.hbm [shape: f32[8,96], index: 12, kind: output, shape index: {2}]
  %13 = xla_tuple %s10, %s11, %s12
  %s14 = sld [smem:[#allocation0]]
  $region86: #{tpu_custom_call.1} parent=0
    _
  %s16 = ssub.s32 1, %s14
  %s17 = scalar_select 0, %s16, %s14
  $region1: #{tpu_custom_call.1} parent=0
    #allocation2 [shape = 'u8[8192]{0}', space=vmem, size = 0x2000, scoped, tag = 'input window, operand 1, single buffered']
    #allocation3 [shape = 's32[1]{0}', space=sflag, size = 0x4, scoped, tag = 'scoped memory for tpu_custom_call.1']
    #allocation4 [shape = 's32[1]{0}', space=sflag, size = 0x4, scoped, tag = 'scoped memory for tpu_custom_call.1']
    #allocation5 [shape = 'u8[4096]{0}', space=vmem, size = 0x1000, scoped, tag = 'input window, operand 4, single buffered']
    #allocation6 [shape = 's32[1]{0}', space=sflag, size = 0x4, scoped, tag = 'scoped memory for tpu_custom_call.1']
    #allocation7 [shape = 'u8[8192]{0}', space=vmem, size = 0x2000, scoped, tag = 'input window, operand 5, single buffered']
    #allocation8 [shape = 'u8[512]{0}', space=vmem, size = 0x400, scoped, tag = 'input window, operand 6, single buffered']
    #allocation9 [shape = 's32[1]{0}', space=sflag, size = 0x4, scoped, tag = 'scoped memory for tpu_custom_call.1']
    #allocation10 [shape = 'u8[512]{0}', space=vmem, size = 0x400, scoped, tag = 'input window, operand 8, single buffered']
    #allocation11 [shape = 'u8[4096]{0}', space=vmem, size = 0x1000, scoped, tag = 'output window, operand 0, single buffered']
    #allocation12 [shape = 'u8[4096]{0}', space=vmem, size = 0x1000, scoped, tag = 'output window, operand 1, single buffered']
    #allocation13 [shape = 's32[1]{0}', space=sflag, size = 0x4, scoped, tag = 'scoped memory for tpu_custom_call.1']
    #allocation14 [shape = 'u8[4096]{0}', space=vmem, size = 0x1000, scoped, tag = 'output window, operand 2, single buffered']
    %18 = vsyncpa [#allocation3], 0
    %19 = vsyncpa [#allocation6], 0
    %20 = vsyncpa [#allocation9], 0
    %21 = vsyncpa [#allocation4], 0
    %22 = vsyncpa [#allocation13], 0
    // Predicated region
    $region2: #{tpu_custom_call.1} parent=1 // pred_check
      _
    $region3: #{tpu_custom_call.1} parent=1 // pred_check_branch
      %24 = sbr.rel (0) target = $region5
    $region4: #{tpu_custom_call.1} parent=1 // pred_region
      _
    $region5: #{tpu_custom_call.1} parent=1 // pred_fallthru
      _
    // Predicated region
    $region6: #{tpu_custom_call.1} parent=1 // pred_check
      _
    $region7: #{tpu_custom_call.1} parent=1 // pred_check_branch
      %26 = sbr.rel (0) target = $region9
    $region8: #{tpu_custom_call.1} parent=1 // pred_region
      %s28 = ssub.s32 256, 256
      %29 = vsyncadd [#allocation3], %s28
      %s30 = sshll.u32 [#allocation2], 4
      %s31 = int_to_ptr.vmem [resolvable:$true] %s30
      %36 = dma.hbm_to_vmem [thread:$0]  %s1, 256, %s31, [#allocation3], 64, 64, 4
    $region9: #{tpu_custom_call.1} parent=1 // pred_fallthru
      _
    // Predicated region
    $region10: #{tpu_custom_call.1} parent=1 // pred_check
      _
    $region11: #{tpu_custom_call.1} parent=1 // pred_check_branch
      %38 = sbr.rel (0) target = $region13
    $region12: #{tpu_custom_call.1} parent=1 // pred_region
      _
    $region13: #{tpu_custom_call.1} parent=1 // pred_fallthru
      _
    // Predicated region
    $region14: #{tpu_custom_call.1} parent=1 // pred_check
      _
    $region15: #{tpu_custom_call.1} parent=1 // pred_check_branch
      %40 = sbr.rel (0) target = $region17
    $region16: #{tpu_custom_call.1} parent=1 // pred_region
      _
    $region17: #{tpu_custom_call.1} parent=1 // pred_fallthru
      _
    // Predicated region
    $region18: #{tpu_custom_call.1} parent=1 // pred_check
      _
    $region19: #{tpu_custom_call.1} parent=1 // pred_check_branch
      %42 = sbr.rel (0) target = $region21
    $region20: #{tpu_custom_call.1} parent=1 // pred_region
      %s44 = ssub.s32 128, 128
      %45 = vsyncadd [#allocation6], %s44
      %s46 = sshll.u32 [#allocation5], 4
      %s47 = int_to_ptr.vmem [resolvable:$true] %s46
      %52 = dma.hbm_to_vmem [thread:$0]  %s4, 128, %s47, [#allocation6], 64, 64, 4
    $region21: #{tpu_custom_call.1} parent=1 // pred_fallthru
      _
    // Predicated region
    $region22: #{tpu_custom_call.1} parent=1 // pred_check
      _
    $region23: #{tpu_custom_call.1} parent=1 // pred_check_branch
      %54 = sbr.rel (0) target = $region25
    $region24: #{tpu_custom_call.1} parent=1 // pred_region
      %s56 = ssub.s32 256, 256
      %57 = vsyncadd [#allocation6], %s56
      %s58 = sshll.u32 [#allocation7], 4
      %s59 = int_to_ptr.vmem [resolvable:$true] %s58
      %64 = dma.hbm_to_vmem [thread:$0]  %s5, 256, %s59, [#allocation6], 64, 64, 4
    $region25: #{tpu_custom_call.1} parent=1 // pred_fallthru
      _
    // Predicated region
    $region26: #{tpu_custom_call.1} parent=1 // pred_check
      _
    $region27: #{tpu_custom_call.1} parent=1 // pred_check_branch
      %66 = sbr.rel (0) target = $region29
    $region28: #{tpu_custom_call.1} parent=1 // pred_region
      %s68 = ssub.s32 16, 16
      %69 = vsyncadd [#allocation9], %s68
      %s71 = sshll.u32 [#allocation8], 4
      %s72 = int_to_ptr.vmem [resolvable:$true] %s71
      %74 = dma.hbm_to_vmem [thread:$0]  %s6, 16, %s72, [#allocation9]
    $region29: #{tpu_custom_call.1} parent=1 // pred_fallthru
      _
    // Predicated region
    $region30: #{tpu_custom_call.1} parent=1 // pred_check
      _
    $region31: #{tpu_custom_call.1} parent=1 // pred_check_branch
      %76 = sbr.rel (0) target = $region33
    $region32: #{tpu_custom_call.1} parent=1 // pred_region
      _
    $region33: #{tpu_custom_call.1} parent=1 // pred_fallthru
      _
    // Predicated region
    $region34: #{tpu_custom_call.1} parent=1 // pred_check
      _
    $region35: #{tpu_custom_call.1} parent=1 // pred_check_branch
      %78 = sbr.rel (0) target = $region37
    $region36: #{tpu_custom_call.1} parent=1 // pred_region
      %s80 = ssub.s32 16, 16
      %81 = vsyncadd [#allocation9], %s80
      %s83 = sshll.u32 [#allocation10], 4
      %s84 = int_to_ptr.vmem [resolvable:$true] %s83
      %86 = dma.hbm_to_vmem [thread:$0]  %s8, 16, %s84, [#allocation9]
    $region37: #{tpu_custom_call.1} parent=1 // pred_fallthru
      _
    // Predicated region
    $region38: #{tpu_custom_call.1} parent=1 // pred_check
      _
    $region39: #{tpu_custom_call.1} parent=1 // pred_check_branch
      %88 = sbr.rel (0) target = $region41
    $region40: #{tpu_custom_call.1} parent=1 // pred_region
      _
    $region41: #{tpu_custom_call.1} parent=1 // pred_fallthru
      _
    // Predicated region
    $region42: #{tpu_custom_call.1} parent=1 // pred_check
      _
    $region43: #{tpu_custom_call.1} parent=1 // pred_check_branch
      %90 = sbr.rel (0) target = $region45
    $region44: #{tpu_custom_call.1} parent=1 // pred_region
      %91 = dma.done [#allocation3], 256
    $region45: #{tpu_custom_call.1} parent=1 // pred_fallthru
      _
    // Predicated region
    $region46: #{tpu_custom_call.1} parent=1 // pred_check
      _
    $region47: #{tpu_custom_call.1} parent=1 // pred_check_branch
      %93 = sbr.rel (0) target = $region49
    $region48: #{tpu_custom_call.1} parent=1 // pred_region
      %94 = dma.done [#allocation6], 128
    $region49: #{tpu_custom_call.1} parent=1 // pred_fallthru
      _
    // Predicated region
    $region50: #{tpu_custom_call.1} parent=1 // pred_check
      _
    $region51: #{tpu_custom_call.1} parent=1 // pred_check_branch
      %96 = sbr.rel (0) target = $region53
    $region52: #{tpu_custom_call.1} parent=1 // pred_region
      %97 = dma.done [#allocation6], 256
    $region53: #{tpu_custom_call.1} parent=1 // pred_fallthru
      _
    // Predicated region
    $region54: #{tpu_custom_call.1} parent=1 // pred_check
      _
    $region55: #{tpu_custom_call.1} parent=1 // pred_check_branch
      %99 = sbr.rel (0) target = $region57
    $region56: #{tpu_custom_call.1} parent=1 // pred_region
      %100 = dma.done [#allocation9], 16
    $region57: #{tpu_custom_call.1} parent=1 // pred_fallthru
      _
    // Predicated region
    $region58: #{tpu_custom_call.1} parent=1 // pred_check
      _
    $region59: #{tpu_custom_call.1} parent=1 // pred_check_branch
      %102 = sbr.rel (0) target = $region61
    $region60: #{tpu_custom_call.1} parent=1 // pred_region
      %103 = dma.done [#allocation9], 16
    $region61: #{tpu_custom_call.1} parent=1 // pred_fallthru
      _
    %v105 = vld [vmem:[#allocation2] sm:$0xf]
    %v106 = vld [vmem:[#allocation2 + $0x4] sm:$0xf]
    %v107 = vld [vmem:[#allocation2 + $0x8] sm:$0xf]
    %v108 = vld [vmem:[#allocation2 + $0xc] sm:$0xf]
    %v109 = vld [vmem:[%s2] sm:$0x1]
    %v110 = vld [vmem:[#allocation5] sm:$0xf]
    %v111 = vld [vmem:[#allocation5 + $0x4] sm:$0xf]
    %v112 = vld [vmem:[#allocation7] sm:$0xf]
    %v113 = vld [vmem:[#allocation7 + $0x4] sm:$0xf]
    %v114 = vld [vmem:[#allocation7 + $0x8] sm:$0xf]
    %v115 = vld [vmem:[#allocation7 + $0xc] sm:$0xf]
    %v116 = vld [vmem:[#allocation8] sm:$0x1]
    %v117 = vld [vmem:[%s7] sm:$0xf]
    %v118 = vld [vmem:[%s7 + $0x4] sm:$0xf]
    %v119 = vld [vmem:[%s7 + $0x8] sm:$0xf]
    %v120 = vld [vmem:[%s7 + $0xc] sm:$0xf]
    %v121 = vld [vmem:[#allocation10] sm:$0x1]
    %v122 = vld [vmem:[%s0] sm:$0xff]
    %v123 = vpack.c.bf16 %v122, %v122
    %v125 = vlaneseq
    %v126 = vshrl.u32 %v125, 7
    %v127 = vsub.s32 0, %v126
    %v128 = vrot.slane %v109, %v127
    %v134 = vunpack.c.l.b16 %v105
    %v135 = vunpack.c.l.b16 %v106
    %v136 = vunpack.c.l.b16 %v107
    %v137 = vunpack.c.l.b16 %v108
    %v138 = vpack.c.b16 %v135, %v134
    %v139 = vpack.c.b16 %v137, %v136
    %vm142 = vcmask 261120
    %v144 = vsel %vm142, %v123, 0
    %146 = vmatprep.subr.bf16.mxu0 0
    %147 = vmatpush1.bf16.msra.mxu0 %v138
    %148 = vmatprep.subr.bf16.mxu0 0
    %149 = vmatpush1.bf16.msra.mxu0 %v139
    %150 = vmatprep.subr.bf16.mxu0 0
    %151 = vmatpush1.bf16.msra.mxu0 0
    %152 = vmatprep.subr.bf16.mxu0 0
    %153 = vmatpush1.bf16.msra.mxu0 0
    %154 = vmatprep.subr.bf16.mxu0 0
    %155 = vmatpush1.bf16.msra.mxu0 0
    %156 = vmatprep.subr.bf16.mxu0 0
    %157 = vmatpush1.bf16.msra.mxu0 0
    %158 = vmatprep.subr.bf16.mxu0 0
    %159 = vmatpush1.bf16.msra.mxu0 0
    %160 = vmatprep.subr.bf16.mxu0 0
    %161 = vmatpush1.bf16.msra.mxu0 0
    %162 = vmatprep.subr.bf16.mxu0 0
    %163 = vmatpush1.bf16.msra.mxu0 0
    %164 = vmatprep.subr.bf16.mxu0 0
    %165 = vmatpush1.bf16.msra.mxu0 0
    %166 = vmatprep.subr.bf16.mxu0 0
    %167 = vmatpush1.bf16.msra.mxu0 0
    %168 = vmatprep.subr.bf16.mxu0 0
    %169 = vmatpush1.bf16.msra.mxu0 0
    %170 = vmatprep.subr.bf16.mxu0 0
    %171 = vmatpush1.bf16.msra.mxu0 0
    %172 = vmatprep.subr.bf16.mxu0 0
    %173 = vmatpush1.bf16.msra.mxu0 0
    %174 = vmatprep.subr.bf16.mxu0 0
    %175 = vmatpush1.bf16.msra.mxu0 0
    %176 = vmatprep.subr.bf16.mxu0 0
    %177 = vmatpush1.bf16.msra.mxu0 0
    %178 = vmatprep.mubr.bf16.mxu0 0
    %179 = vmatmul.mubr.bf16.gmra.mrb[0].mxu0 %v144
    %v180 = vpop.f32.mrb[0].mxu0
    %v181 = vadd.f32 %v128, %v180
    %v182 = vpop.f32.mrb[0].mxu0
    %v183 = vpop.f32.mrb[0].mxu0
    %v184 = vpop.f32.mrb[0].mxu0
    %185 = vdwg.mxu0
    %v186 = vtanh.pop %v181
    %v187 = vld [vmem:[%s3] sm:$0x1]
    %v188 = vlaneseq
    %v189 = vand.u32 %v188, 127
    %v190 = vpack.c.bf16 %v186, %v186
    %v192 = vlaneseq
    %v193 = vshrl.u32 %v192, 7
    %v194 = vsub.s32 0, %v193
    %v195 = vrot.slane %v116, %v194
    %v201 = vunpack.c.l.b16 %v112
    %v202 = vunpack.c.l.b16 %v113
    %v203 = vunpack.c.l.b16 %v114
    %v204 = vunpack.c.l.b16 %v115
    %v205 = vpack.c.b16 %v202, %v201
    %v206 = vpack.c.b16 %v204, %v203
    %v210 = vsel %vm142, %v190, 0
    %212 = vmatprep.subr.bf16.mxu0 0
    %213 = vmatpush1.bf16.msra.mxu0 %v205
    %214 = vmatprep.subr.bf16.mxu0 0
    %215 = vmatpush1.bf16.msra.mxu0 %v206
    %216 = vmatprep.subr.bf16.mxu0 0
    %217 = vmatpush1.bf16.msra.mxu0 0
    %218 = vmatprep.subr.bf16.mxu0 0
    %219 = vmatpush1.bf16.msra.mxu0 0
    %220 = vmatprep.subr.bf16.mxu0 0
    %221 = vmatpush1.bf16.msra.mxu0 0
    %222 = vmatprep.subr.bf16.mxu0 0
    %223 = vmatpush1.bf16.msra.mxu0 0
    %224 = vmatprep.subr.bf16.mxu0 0
    %225 = vmatpush1.bf16.msra.mxu0 0
    %226 = vmatprep.subr.bf16.mxu0 0
    %227 = vmatpush1.bf16.msra.mxu0 0
    %228 = vmatprep.subr.bf16.mxu0 0
    %229 = vmatpush1.bf16.msra.mxu0 0
    %230 = vmatprep.subr.bf16.mxu0 0
    %231 = vmatpush1.bf16.msra.mxu0 0
    %232 = vmatprep.subr.bf16.mxu0 0
    %233 = vmatpush1.bf16.msra.mxu0 0
    %234 = vmatprep.subr.bf16.mxu0 0
    %235 = vmatpush1.bf16.msra.mxu0 0
    %236 = vmatprep.subr.bf16.mxu0 0
    %237 = vmatpush1.bf16.msra.mxu0 0
    %238 = vmatprep.subr.bf16.mxu0 0
    %239 = vmatpush1.bf16.msra.mxu0 0
    %240 = vmatprep.subr.bf16.mxu0 0
    %241 = vmatpush1.bf16.msra.mxu0 0
    %242 = vmatprep.subr.bf16.mxu0 0
    %243 = vmatpush1.bf16.msra.mxu0 0
    %244 = vmatprep.mubr.bf16.mxu0 0
    %245 = vmatmul.mubr.bf16.gmra.mrb[0].mxu0 %v210
    %v246 = vpop.f32.mrb[0].mxu0
    %v247 = vadd.f32 %v195, %v246
    %v248 = vpop.f32.mrb[0].mxu0
    %v249 = vpop.f32.mrb[0].mxu0
    %v250 = vpop.f32.mrb[0].mxu0
    %251 = vdwg.mxu0
    %v253 = vlaneseq
    %v254 = vshrl.u32 %v253, 7
    %v255 = vsub.s32 0, %v254
    %v256 = vrot.slane %v187, %v255
    %v258 = vadd.f32 %v256, %v247
    %v259 = vxor.u32 %v258, 2147483648
    %v260 = vmul.f32 %v259, 1.442695
    %v261 = vpow.pop %v260
    %v262 = vadd.f32 %v261, 1.0
    %v263 = vrcp.pop %v262
    %v264 = vmul.f32 1.0, %v263
    %266 = vrot.lane.b32.xlu0 %v247, 64
    %v267 = vpop.permute.xlu0 %266
    %v269 = vmul.f32 %v264, %v267
    %271 = vrot.lane.b32.xlu0 %v269, 64
    %v272 = vpop.permute.xlu0 %271
    %v274 = vadd.f32 %v256, %v272
    %v275 = vtanh.pop %v274
    %v276 = vsub.f32 1.0, %v264
    %278 = vrot.lane.b32.xlu0 %v275, 96
    %v279 = vpop.permute.xlu0 %278
    %v281 = vmul.f32 %v276, %v279
    %283 = vrot.lane.b32.xlu0 %v186, 32
    %v284 = vpop.permute.xlu0 %283
    %v286 = vmul.f32 %v264, %v284
    %v287 = vadd.f32 %v281, %v286
    %v288 = vpack.c.bf16 %v287, %v287
    %v290 = vlaneseq
    %v291 = vshrl.u32 %v290, 7
    %v292 = vsub.s32 0, %v291
    %v293 = vrot.slane %v121, %v292
    %296 = vrot.lane.b32.xlu0 %v288, 96
    %v297 = vpop.permute.xlu0 %296
    %v302 = vunpack.c.l.b16 %v117
    %v303 = vunpack.c.l.b16 %v118
    %v304 = vunpack.c.l.b16 %v119
    %v305 = vunpack.c.l.b16 %v120
    %v306 = vpack.c.b16 %v303, %v302
    %v307 = vpack.c.b16 %v305, %v304
    %v311 = vsel %vm142, %v297, 0
    %313 = vmatprep.subr.bf16.mxu0 0
    %314 = vmatpush1.bf16.msra.mxu0 %v306
    %315 = vmatprep.subr.bf16.mxu0 0
    %316 = vmatpush1.bf16.msra.mxu0 %v307
    %317 = vmatprep.subr.bf16.mxu0 0
    %318 = vmatpush1.bf16.msra.mxu0 0
    %319 = vmatprep.subr.bf16.mxu0 0
    %320 = vmatpush1.bf16.msra.mxu0 0
    %321 = vmatprep.subr.bf16.mxu0 0
    %322 = vmatpush1.bf16.msra.mxu0 0
    %323 = vmatprep.subr.bf16.mxu0 0
    %324 = vmatpush1.bf16.msra.mxu0 0
    %325 = vmatprep.subr.bf16.mxu0 0
    %326 = vmatpush1.bf16.msra.mxu0 0
    %327 = vmatprep.subr.bf16.mxu0 0
    %328 = vmatpush1.bf16.msra.mxu0 0
    %329 = vmatprep.subr.bf16.mxu0 0
    %330 = vmatpush1.bf16.msra.mxu0 0
    %331 = vmatprep.subr.bf16.mxu0 0
    %332 = vmatpush1.bf16.msra.mxu0 0
    %333 = vmatprep.subr.bf16.mxu0 0
    %334 = vmatpush1.bf16.msra.mxu0 0
    %335 = vmatprep.subr.bf16.mxu0 0
    %336 = vmatpush1.bf16.msra.mxu0 0
    %337 = vmatprep.subr.bf16.mxu0 0
    %338 = vmatpush1.bf16.msra.mxu0 0
    %339 = vmatprep.subr.bf16.mxu0 0
    %340 = vmatpush1.bf16.msra.mxu0 0
    %341 = vmatprep.subr.bf16.mxu0 0
    %342 = vmatpush1.bf16.msra.mxu0 0
    %343 = vmatprep.subr.bf16.mxu0 0
    %344 = vmatpush1.bf16.msra.mxu0 0
    %345 = vmatprep.mubr.bf16.mxu0 0
    %346 = vmatmul.mubr.bf16.gmra.mrb[0].mxu0 %v311
    %v347 = vpop.f32.mrb[0].mxu0
    %v348 = vadd.f32 %v293, %v347
    %v349 = vpop.f32.mrb[0].mxu0
    %v350 = vpop.f32.mrb[0].mxu0
    %v351 = vpop.f32.mrb[0].mxu0
    %352 = vdwg.mxu0
    %v353 = vld [vmem:[%s9] sm:$0xff]
    %v354 = vadd.f32 %v348, %v353
    %vm355 = vcmask 130048
    %v356 = vsel %vm355, %v354, -inf
    %357 = vmax.xlane.f32.xlu0 %v356
    %v358 = vpop.xlane.xlu0 %357
    %vm359 = vcmp.ge.f32.partialorder %v354, %v358
    %v360 = vsel %vm359, %v189, 16
    %v361 = vsel %vm355, %v360, 2147483647
    %v362 = vand.u32 %v361, 65535
    %v363 = vshra.s32 %v361, 16
    %v364 = vcvt.s32.f32 %v362
    %v365 = vcvt.s32.f32 %v363
    %366 = vmin.xlane.f32.xlu0 %v365
    %v367 = vpop.xlane.xlu0 %366
    %vm368 = vcmp.eq.f32.partialorder %v365, %v367
    %v369 = vsel %vm368, %v364, inf
    %370 = vmin.xlane.f32.xlu0 %v369
    %v371 = vpop.xlane.xlu0 %370
    %v372 = vcvt.f32.s32 %v371
    %v373 = vcvt.f32.s32 %v367
    %v374 = vshll.u32 %v373, 16
    %v375 = vadd.s32 %v374, %v372
    %vm376 = vcmp.eq.s32.totalorder %v189, %v375
    %v377 = vsel %vm376, 1, 0
    %v378 = vcvt.s32.f32 %v377
    %v379 = vsel %vm355, %v348, -inf
    %380 = vmax.xlane.f32.xlu0 %v379
    %v381 = vpop.xlane.xlu0 %380
    %v382 = vsub.f32 %v348, %v381
    %v383 = vmul.f32 %v382, 1.442695
    %v384 = vpow.pop %v383
    %v385 = vsel %vm355, %v384, 0.0
    %386 = vadd.xlane.f32.xlu0 %v385
    %v387 = vpop.xlane.xlu0 %386
    %v388 = vlog2.pop %v387
    %v389 = vmul.f32 %v388, 0.6931472
    %v390 = vsub.f32 %v382, %v389
    %v391 = vmul.f32 %v390, %v378
    %v392 = vsel %vm355, %v391, 0.0
    %393 = vadd.xlane.f32.xlu0 %v392
    %v394 = vpop.xlane.xlu0 %393
    %v395 = vpack.c.bf16 %v378, %v378
    %v398 = vunpack.c.l.b16 %v110
    %v399 = vunpack.c.l.b16 %v111
    %v400 = vpack.c.b16 %v399, %v398
    %v403 = vsel %vm355, %v395, 0
    %405 = vmatprep.subr.bf16.mxu0 0
    %406 = vmatpush1.bf16.msra.mxu0 %v400
    %407 = vmatprep.subr.bf16.mxu0 0
    %408 = vmatpush1.bf16.msra.mxu0 0
    %409 = vmatprep.subr.bf16.mxu0 0
    %410 = vmatpush1.bf16.msra.mxu0 0
    %411 = vmatprep.subr.bf16.mxu0 0
    %412 = vmatpush1.bf16.msra.mxu0 0
    %413 = vmatprep.subr.bf16.mxu0 0
    %414 = vmatpush1.bf16.msra.mxu0 0
    %415 = vmatprep.subr.bf16.mxu0 0
    %416 = vmatpush1.bf16.msra.mxu0 0
    %417 = vmatprep.subr.bf16.mxu0 0
    %418 = vmatpush1.bf16.msra.mxu0 0
    %419 = vmatprep.subr.bf16.mxu0 0
    %420 = vmatpush1.bf16.msra.mxu0 0
    %421 = vmatprep.subr.bf16.mxu0 0
    %422 = vmatpush1.bf16.msra.mxu0 0
    %423 = vmatprep.subr.bf16.mxu0 0
    %424 = vmatpush1.bf16.msra.mxu0 0
    %425 = vmatprep.subr.bf16.mxu0 0
    %426 = vmatpush1.bf16.msra.mxu0 0
    %427 = vmatprep.subr.bf16.mxu0 0
    %428 = vmatpush1.bf16.msra.mxu0 0
    %429 = vmatprep.subr.bf16.mxu0 0
    %430 = vmatpush1.bf16.msra.mxu0 0
    %431 = vmatprep.subr.bf16.mxu0 0
    %432 = vmatpush1.bf16.msra.mxu0 0
    %433 = vmatprep.subr.bf16.mxu0 0
    %434 = vmatpush1.bf16.msra.mxu0 0
    %435 = vmatprep.subr.bf16.mxu0 0
    %436 = vmatpush1.bf16.msra.mxu0 0
    %437 = vmatprep.mubr.bf16.mxu0 0
    %438 = vmatmul.mubr.bf16.gmra.mrb[0].mxu0 %v403
    %v439 = vpop.f32.mrb[0].mxu0
    %v440 = vadd.f32 0.0, %v439
    %v441 = vpop.f32.mrb[0].mxu0
    %v442 = vpop.f32.mrb[0].mxu0
    %v443 = vpop.f32.mrb[0].mxu0
    %444 = vdwg.mxu0
    %445 = vmatprep.subr.bf16.mxu0 0
    %446 = vmatpush1.bf16.msra.mxu0 %v205
    %447 = vmatprep.subr.bf16.mxu0 0
    %448 = vmatpush1.bf16.msra.mxu0 %v206
    %449 = vmatprep.subr.bf16.mxu0 0
    %450 = vmatpush1.bf16.msra.mxu0 0
    %451 = vmatprep.subr.bf16.mxu0 0
    %452 = vmatpush1.bf16.msra.mxu0 0
    %453 = vmatprep.subr.bf16.mxu0 0
    %454 = vmatpush1.bf16.msra.mxu0 0
    %455 = vmatprep.subr.bf16.mxu0 0
    %456 = vmatpush1.bf16.msra.mxu0 0
    %457 = vmatprep.subr.bf16.mxu0 0
    %458 = vmatpush1.bf16.msra.mxu0 0
    %459 = vmatprep.subr.bf16.mxu0 0
    %460 = vmatpush1.bf16.msra.mxu0 0
    %461 = vmatprep.subr.bf16.mxu0 0
    %462 = vmatpush1.bf16.msra.mxu0 0
    %463 = vmatprep.subr.bf16.mxu0 0
    %464 = vmatpush1.bf16.msra.mxu0 0
    %465 = vmatprep.subr.bf16.mxu0 0
    %466 = vmatpush1.bf16.msra.mxu0 0
    %467 = vmatprep.subr.bf16.mxu0 0
    %468 = vmatpush1.bf16.msra.mxu0 0
    %469 = vmatprep.subr.bf16.mxu0 0
    %470 = vmatpush1.bf16.msra.mxu0 0
    %471 = vmatprep.subr.bf16.mxu0 0
    %472 = vmatpush1.bf16.msra.mxu0 0
    %473 = vmatprep.subr.bf16.mxu0 0
    %474 = vmatpush1.bf16.msra.mxu0 0
    %475 = vmatprep.subr.bf16.mxu0 0
    %476 = vmatpush1.bf16.msra.mxu0 0
    %477 = vmatprep.mubr.bf16.mxu0 0
    %478 = vmatmul.mubr.bf16.gmra.mrb[0].mxu0 %v311
    %v479 = vpop.f32.mrb[0].mxu0
    %v480 = vadd.f32 %v195, %v479
    %v481 = vpop.f32.mrb[0].mxu0
    %v482 = vpop.f32.mrb[0].mxu0
    %v483 = vpop.f32.mrb[0].mxu0
    %484 = vdwg.mxu0
    %v485 = vadd.f32 %v440, %v480
    %v486 = vxor.u32 %v485, 2147483648
    %v487 = vmul.f32 %v486, 1.442695
    %v488 = vpow.pop %v487
    %v489 = vadd.f32 %v488, 1.0
    %v490 = vrcp.pop %v489
    %v491 = vmul.f32 1.0, %v490
    %493 = vrot.lane.b32.xlu0 %v480, 64
    %v494 = vpop.permute.xlu0 %493
    %v496 = vmul.f32 %v491, %v494
    %498 = vrot.lane.b32.xlu0 %v496, 64
    %v499 = vpop.permute.xlu0 %498
    %v501 = vadd.f32 %v440, %v499
    %v502 = vtanh.pop %v501
    %v503 = vsub.f32 1.0, %v491
    %505 = vrot.lane.b32.xlu0 %v502, 96
    %v506 = vpop.permute.xlu0 %505
    %v508 = vmul.f32 %v503, %v506
    %v509 = vmul.f32 %v491, %v287
    %v510 = vadd.f32 %v508, %v509
    %v511 = vpack.c.bf16 %v510, %v510
    %513 = vrot.lane.b32.xlu0 %v511, 96
    %v514 = vpop.permute.xlu0 %513
    %v516 = vsel %vm142, %v514, 0
    %518 = vmatprep.subr.bf16.mxu0 0
    %519 = vmatpush1.bf16.msra.mxu0 %v306
    %520 = vmatprep.subr.bf16.mxu0 0
    %521 = vmatpush1.bf16.msra.mxu0 %v307
    %522 = vmatprep.subr.bf16.mxu0 0
    %523 = vmatpush1.bf16.msra.mxu0 0
    %524 = vmatprep.subr.bf16.mxu0 0
    %525 = vmatpush1.bf16.msra.mxu0 0
    %526 = vmatprep.subr.bf16.mxu0 0
    %527 = vmatpush1.bf16.msra.mxu0 0
    %528 = vmatprep.subr.bf16.mxu0 0
    %529 = vmatpush1.bf16.msra.mxu0 0
    %530 = vmatprep.subr.bf16.mxu0 0
    %531 = vmatpush1.bf16.msra.mxu0 0
    %532 = vmatprep.subr.bf16.mxu0 0
    %533 = vmatpush1.bf16.msra.mxu0 0
    %534 = vmatprep.subr.bf16.mxu0 0
    %535 = vmatpush1.bf16.msra.mxu0 0
    %536 = vmatprep.subr.bf16.mxu0 0
    %537 = vmatpush1.bf16.msra.mxu0 0
    %538 = vmatprep.subr.bf16.mxu0 0
    %539 = vmatpush1.bf16.msra.mxu0 0
    %540 = vmatprep.subr.bf16.mxu0 0
    %541 = vmatpush1.bf16.msra.mxu0 0
    %542 = vmatprep.subr.bf16.mxu0 0
    %543 = vmatpush1.bf16.msra.mxu0 0
    %544 = vmatprep.subr.bf16.mxu0 0
    %545 = vmatpush1.bf16.msra.mxu0 0
    %546 = vmatprep.subr.bf16.mxu0 0
    %547 = vmatpush1.bf16.msra.mxu0 0
    %548 = vmatprep.subr.bf16.mxu0 0
    %549 = vmatpush1.bf16.msra.mxu0 0
    %550 = vmatprep.mubr.bf16.mxu0 0
    %551 = vmatmul.mubr.bf16.gmra.mrb[0].mxu0 %v516
    %v552 = vpop.f32.mrb[0].mxu0
    %v553 = vadd.f32 %v293, %v552
    %v554 = vpop.f32.mrb[0].mxu0
    %v555 = vpop.f32.mrb[0].mxu0
    %v556 = vpop.f32.mrb[0].mxu0
    %557 = vdwg.mxu0
    %s558 = scalar_lea.vmem %s9, 8
    %v559 = vld [vmem:[%s558] sm:$0xff]
    %v560 = vadd.f32 %v553, %v559
    %v561 = vsel %vm355, %v560, -inf
    %562 = vmax.xlane.f32.xlu0 %v561
    %v563 = vpop.xlane.xlu0 %562
    %vm564 = vcmp.ge.f32.partialorder %v560, %v563
    %v565 = vsel %vm564, %v189, 16
    %v566 = vsel %vm355, %v565, 2147483647
    %v567 = vand.u32 %v566, 65535
    %v568 = vshra.s32 %v566, 16
    %v569 = vcvt.s32.f32 %v567
    %v570 = vcvt.s32.f32 %v568
    %571 = vmin.xlane.f32.xlu0 %v570
    %v572 = vpop.xlane.xlu0 %571
    %vm573 = vcmp.eq.f32.partialorder %v570, %v572
    %v574 = vsel %vm573, %v569, inf
    %575 = vmin.xlane.f32.xlu0 %v574
    %v576 = vpop.xlane.xlu0 %575
    %v577 = vcvt.f32.s32 %v576
    %v578 = vcvt.f32.s32 %v572
    %v579 = vshll.u32 %v578, 16
    %v580 = vadd.s32 %v579, %v577
    %vm581 = vcmp.eq.s32.totalorder %v189, %v580
    %v582 = vsel %vm581, 1, 0
    %v583 = vcvt.s32.f32 %v582
    %v584 = vsel %vm355, %v553, -inf
    %585 = vmax.xlane.f32.xlu0 %v584
    %v586 = vpop.xlane.xlu0 %585
    %v587 = vsub.f32 %v553, %v586
    %v588 = vmul.f32 %v587, 1.442695
    %v589 = vpow.pop %v588
    %v590 = vsel %vm355, %v589, 0.0
    %591 = vadd.xlane.f32.xlu0 %v590
    %v592 = vpop.xlane.xlu0 %591
    %v593 = vlog2.pop %v592
    %v594 = vmul.f32 %v593, 0.6931472
    %v595 = vsub.f32 %v587, %v594
    %v596 = vmul.f32 %v595, %v583
    %v597 = vsel %vm355, %v596, 0.0
    %598 = vadd.xlane.f32.xlu0 %v597
    %v599 = vpop.xlane.xlu0 %598
    %v600 = vpack.c.bf16 %v583, %v583
    %v602 = vsel %vm355, %v600, 0
    %604 = vmatprep.subr.bf16.mxu0 0
    %605 = vmatpush1.bf16.msra.mxu0 %v400
    %606 = vmatprep.subr.bf16.mxu0 0
    %607 = vmatpush1.bf16.msra.mxu0 0
    %608 = vmatprep.subr.bf16.mxu0 0
    %609 = vmatpush1.bf16.msra.mxu0 0
    %610 = vmatprep.subr.bf16.mxu0 0
    %611 = vmatpush1.bf16.msra.mxu0 0
    %612 = vmatprep.subr.bf16.mxu0 0
    %613 = vmatpush1.bf16.msra.mxu0 0
    %614 = vmatprep.subr.bf16.mxu0 0
    %615 = vmatpush1.bf16.msra.mxu0 0
    %616 = vmatprep.subr.bf16.mxu0 0
    %617 = vmatpush1.bf16.msra.mxu0 0
    %618 = vmatprep.subr.bf16.mxu0 0
    %619 = vmatpush1.bf16.msra.mxu0 0
    %620 = vmatprep.subr.bf16.mxu0 0
    %621 = vmatpush1.bf16.msra.mxu0 0
    %622 = vmatprep.subr.bf16.mxu0 0
    %623 = vmatpush1.bf16.msra.mxu0 0
    %624 = vmatprep.subr.bf16.mxu0 0
    %625 = vmatpush1.bf16.msra.mxu0 0
    %626 = vmatprep.subr.bf16.mxu0 0
    %627 = vmatpush1.bf16.msra.mxu0 0
    %628 = vmatprep.subr.bf16.mxu0 0
    %629 = vmatpush1.bf16.msra.mxu0 0
    %630 = vmatprep.subr.bf16.mxu0 0
    %631 = vmatpush1.bf16.msra.mxu0 0
    %632 = vmatprep.subr.bf16.mxu0 0
    %633 = vmatpush1.bf16.msra.mxu0 0
    %634 = vmatprep.subr.bf16.mxu0 0
    %635 = vmatpush1.bf16.msra.mxu0 0
    %636 = vmatprep.mubr.bf16.mxu0 0
    %637 = vmatmul.mubr.bf16.gmra.mrb[0].mxu0 %v602
    %v638 = vpop.f32.mrb[0].mxu0
    %v639 = vadd.f32 0.0, %v638
    %v640 = vpop.f32.mrb[0].mxu0
    %v641 = vpop.f32.mrb[0].mxu0
    %v642 = vpop.f32.mrb[0].mxu0
    %643 = vdwg.mxu0
    %644 = vmatprep.subr.bf16.mxu0 0
    %645 = vmatpush1.bf16.msra.mxu0 %v205
    %646 = vmatprep.subr.bf16.mxu0 0
    %647 = vmatpush1.bf16.msra.mxu0 %v206
    %648 = vmatprep.subr.bf16.mxu0 0
    %649 = vmatpush1.bf16.msra.mxu0 0
    %650 = vmatprep.subr.bf16.mxu0 0
    %651 = vmatpush1.bf16.msra.mxu0 0
    %652 = vmatprep.subr.bf16.mxu0 0
    %653 = vmatpush1.bf16.msra.mxu0 0
    %654 = vmatprep.subr.bf16.mxu0 0
    %655 = vmatpush1.bf16.msra.mxu0 0
    %656 = vmatprep.subr.bf16.mxu0 0
    %657 = vmatpush1.bf16.msra.mxu0 0
    %658 = vmatprep.subr.bf16.mxu0 0
    %659 = vmatpush1.bf16.msra.mxu0 0
    %660 = vmatprep.subr.bf16.mxu0 0
    %661 = vmatpush1.bf16.msra.mxu0 0
    %662 = vmatprep.subr.bf16.mxu0 0
    %663 = vmatpush1.bf16.msra.mxu0 0
    %664 = vmatprep.subr.bf16.mxu0 0
    %665 = vmatpush1.bf16.msra.mxu0 0
    %666 = vmatprep.subr.bf16.mxu0 0
    %667 = vmatpush1.bf16.msra.mxu0 0
    %668 = vmatprep.subr.bf16.mxu0 0
    %669 = vmatpush1.bf16.msra.mxu0 0
    %670 = vmatprep.subr.bf16.mxu0 0
    %671 = vmatpush1.bf16.msra.mxu0 0
    %672 = vmatprep.subr.bf16.mxu0 0
    %673 = vmatpush1.bf16.msra.mxu0 0
    %674 = vmatprep.subr.bf16.mxu0 0
    %675 = vmatpush1.bf16.msra.mxu0 0
    %676 = vmatprep.mubr.bf16.mxu0 0
    %677 = vmatmul.mubr.bf16.gmra.mrb[0].mxu0 %v516
    %v678 = vpop.f32.mrb[0].mxu0
    %v679 = vadd.f32 %v195, %v678
    %v680 = vpop.f32.mrb[0].mxu0
    %v681 = vpop.f32.mrb[0].mxu0
    %v682 = vpop.f32.mrb[0].mxu0
    %683 = vdwg.mxu0
    %v684 = vadd.f32 %v639, %v679
    %v685 = vxor.u32 %v684, 2147483648
    %v686 = vmul.f32 %v685, 1.442695
    %v687 = vpow.pop %v686
    %v688 = vadd.f32 %v687, 1.0
    %v689 = vrcp.pop %v688
    %v690 = vmul.f32 1.0, %v689
    %692 = vrot.lane.b32.xlu0 %v679, 64
    %v693 = vpop.permute.xlu0 %692
    %v695 = vmul.f32 %v690, %v693
    %697 = vrot.lane.b32.xlu0 %v695, 64
    %v698 = vpop.permute.xlu0 %697
    %v700 = vadd.f32 %v639, %v698
    %v701 = vtanh.pop %v700
    %v702 = vsub.f32 1.0, %v690
    %704 = vrot.lane.b32.xlu0 %v701, 96
    %v705 = vpop.permute.xlu0 %704
    %v707 = vmul.f32 %v702, %v705
    %v708 = vmul.f32 %v690, %v510
    %v709 = vadd.f32 %v707, %v708
    %v710 = vpack.c.bf16 %v709, %v709
    %712 = vrot.lane.b32.xlu0 %v710, 96
    %v713 = vpop.permute.xlu0 %712
    %v715 = vsel %vm142, %v713, 0
    %717 = vmatprep.subr.bf16.mxu0 0
    %718 = vmatpush1.bf16.msra.mxu0 %v306
    %719 = vmatprep.subr.bf16.mxu0 0
    %720 = vmatpush1.bf16.msra.mxu0 %v307
    %721 = vmatprep.subr.bf16.mxu0 0
    %722 = vmatpush1.bf16.msra.mxu0 0
    %723 = vmatprep.subr.bf16.mxu0 0
    %724 = vmatpush1.bf16.msra.mxu0 0
    %725 = vmatprep.subr.bf16.mxu0 0
    %726 = vmatpush1.bf16.msra.mxu0 0
    %727 = vmatprep.subr.bf16.mxu0 0
    %728 = vmatpush1.bf16.msra.mxu0 0
    %729 = vmatprep.subr.bf16.mxu0 0
    %730 = vmatpush1.bf16.msra.mxu0 0
    %731 = vmatprep.subr.bf16.mxu0 0
    %732 = vmatpush1.bf16.msra.mxu0 0
    %733 = vmatprep.subr.bf16.mxu0 0
    %734 = vmatpush1.bf16.msra.mxu0 0
    %735 = vmatprep.subr.bf16.mxu0 0
    %736 = vmatpush1.bf16.msra.mxu0 0
    %737 = vmatprep.subr.bf16.mxu0 0
    %738 = vmatpush1.bf16.msra.mxu0 0
    %739 = vmatprep.subr.bf16.mxu0 0
    %740 = vmatpush1.bf16.msra.mxu0 0
    %741 = vmatprep.subr.bf16.mxu0 0
    %742 = vmatpush1.bf16.msra.mxu0 0
    %743 = vmatprep.subr.bf16.mxu0 0
    %744 = vmatpush1.bf16.msra.mxu0 0
    %745 = vmatprep.subr.bf16.mxu0 0
    %746 = vmatpush1.bf16.msra.mxu0 0
    %747 = vmatprep.subr.bf16.mxu0 0
    %748 = vmatpush1.bf16.msra.mxu0 0
    %749 = vmatprep.mubr.bf16.mxu0 0
    %750 = vmatmul.mubr.bf16.gmra.mrb[0].mxu0 %v715
    %v751 = vpop.f32.mrb[0].mxu0
    %v752 = vadd.f32 %v293, %v751
    %v753 = vpop.f32.mrb[0].mxu0
    %v754 = vpop.f32.mrb[0].mxu0
    %v755 = vpop.f32.mrb[0].mxu0
    %756 = vdwg.mxu0
    %s757 = scalar_lea.vmem %s9, 16
    %v758 = vld [vmem:[%s757] sm:$0xff]
    %v759 = vadd.f32 %v752, %v758
    %v760 = vsel %vm355, %v759, -inf
    %761 = vmax.xlane.f32.xlu0 %v760
    %v762 = vpop.xlane.xlu0 %761
    %vm763 = vcmp.ge.f32.partialorder %v759, %v762
    %v764 = vsel %vm763, %v189, 16
    %v765 = vsel %vm355, %v764, 2147483647
    %v766 = vand.u32 %v765, 65535
    %v767 = vshra.s32 %v765, 16
    %v768 = vcvt.s32.f32 %v766
    %v769 = vcvt.s32.f32 %v767
    %770 = vmin.xlane.f32.xlu0 %v769
    %v771 = vpop.xlane.xlu0 %770
    %vm772 = vcmp.eq.f32.partialorder %v769, %v771
    %v773 = vsel %vm772, %v768, inf
    %774 = vmin.xlane.f32.xlu0 %v773
    %v775 = vpop.xlane.xlu0 %774
    %v776 = vcvt.f32.s32 %v775
    %v777 = vcvt.f32.s32 %v771
    %v778 = vshll.u32 %v777, 16
    %v779 = vadd.s32 %v778, %v776
    %vm780 = vcmp.eq.s32.totalorder %v189, %v779
    %v781 = vsel %vm780, 1, 0
    %v782 = vcvt.s32.f32 %v781
    %v783 = vsel %vm355, %v752, -inf
    %784 = vmax.xlane.f32.xlu0 %v783
    %v785 = vpop.xlane.xlu0 %784
    %v786 = vsub.f32 %v752, %v785
    %v787 = vmul.f32 %v786, 1.442695
    %v788 = vpow.pop %v787
    %v789 = vsel %vm355, %v788, 0.0
    %790 = vadd.xlane.f32.xlu0 %v789
    %v791 = vpop.xlane.xlu0 %790
    %v792 = vlog2.pop %v791
    %v793 = vmul.f32 %v792, 0.6931472
    %v794 = vsub.f32 %v786, %v793
    %v795 = vmul.f32 %v794, %v782
    %v796 = vsel %vm355, %v795, 0.0
    %797 = vadd.xlane.f32.xlu0 %v796
    %v798 = vpop.xlane.xlu0 %797
    %v799 = vpack.c.bf16 %v782, %v782
    %v801 = vsel %vm355, %v799, 0
    %803 = vmatprep.subr.bf16.mxu0 0
    %804 = vmatpush1.bf16.msra.mxu0 %v400
    %805 = vmatprep.subr.bf16.mxu0 0
    %806 = vmatpush1.bf16.msra.mxu0 0
    %807 = vmatprep.subr.bf16.mxu0 0
    %808 = vmatpush1.bf16.msra.mxu0 0
    %809 = vmatprep.subr.bf16.mxu0 0
    %810 = vmatpush1.bf16.msra.mxu0 0
    %811 = vmatprep.subr.bf16.mxu0 0
    %812 = vmatpush1.bf16.msra.mxu0 0
    %813 = vmatprep.subr.bf16.mxu0 0
    %814 = vmatpush1.bf16.msra.mxu0 0
    %815 = vmatprep.subr.bf16.mxu0 0
    %816 = vmatpush1.bf16.msra.mxu0 0
    %817 = vmatprep.subr.bf16.mxu0 0
    %818 = vmatpush1.bf16.msra.mxu0 0
    %819 = vmatprep.subr.bf16.mxu0 0
    %820 = vmatpush1.bf16.msra.mxu0 0
    %821 = vmatprep.subr.bf16.mxu0 0
    %822 = vmatpush1.bf16.msra.mxu0 0
    %823 = vmatprep.subr.bf16.mxu0 0
    %824 = vmatpush1.bf16.msra.mxu0 0
    %825 = vmatprep.subr.bf16.mxu0 0
    %826 = vmatpush1.bf16.msra.mxu0 0
    %827 = vmatprep.subr.bf16.mxu0 0
    %828 = vmatpush1.bf16.msra.mxu0 0
    %829 = vmatprep.subr.bf16.mxu0 0
    %830 = vmatpush1.bf16.msra.mxu0 0
    %831 = vmatprep.subr.bf16.mxu0 0
    %832 = vmatpush1.bf16.msra.mxu0 0
    %833 = vmatprep.subr.bf16.mxu0 0
    %834 = vmatpush1.bf16.msra.mxu0 0
    %835 = vmatprep.mubr.bf16.mxu0 0
    %836 = vmatmul.mubr.bf16.gmra.mrb[0].mxu0 %v801
    %v837 = vpop.f32.mrb[0].mxu0
    %v838 = vadd.f32 0.0, %v837
    %v839 = vpop.f32.mrb[0].mxu0
    %v840 = vpop.f32.mrb[0].mxu0
    %v841 = vpop.f32.mrb[0].mxu0
    %842 = vdwg.mxu0
    %843 = vmatprep.subr.bf16.mxu0 0
    %844 = vmatpush1.bf16.msra.mxu0 %v205
    %845 = vmatprep.subr.bf16.mxu0 0
    %846 = vmatpush1.bf16.msra.mxu0 %v206
    %847 = vmatprep.subr.bf16.mxu0 0
    %848 = vmatpush1.bf16.msra.mxu0 0
    %849 = vmatprep.subr.bf16.mxu0 0
    %850 = vmatpush1.bf16.msra.mxu0 0
    %851 = vmatprep.subr.bf16.mxu0 0
    %852 = vmatpush1.bf16.msra.mxu0 0
    %853 = vmatprep.subr.bf16.mxu0 0
    %854 = vmatpush1.bf16.msra.mxu0 0
    %855 = vmatprep.subr.bf16.mxu0 0
    %856 = vmatpush1.bf16.msra.mxu0 0
    %857 = vmatprep.subr.bf16.mxu0 0
    %858 = vmatpush1.bf16.msra.mxu0 0
    %859 = vmatprep.subr.bf16.mxu0 0
    %860 = vmatpush1.bf16.msra.mxu0 0
    %861 = vmatprep.subr.bf16.mxu0 0
    %862 = vmatpush1.bf16.msra.mxu0 0
    %863 = vmatprep.subr.bf16.mxu0 0
    %864 = vmatpush1.bf16.msra.mxu0 0
    %865 = vmatprep.subr.bf16.mxu0 0
    %866 = vmatpush1.bf16.msra.mxu0 0
    %867 = vmatprep.subr.bf16.mxu0 0
    %868 = vmatpush1.bf16.msra.mxu0 0
    %869 = vmatprep.subr.bf16.mxu0 0
    %870 = vmatpush1.bf16.msra.mxu0 0
    %871 = vmatprep.subr.bf16.mxu0 0
    %872 = vmatpush1.bf16.msra.mxu0 0
    %873 = vmatprep.subr.bf16.mxu0 0
    %874 = vmatpush1.bf16.msra.mxu0 0
    %875 = vmatprep.mubr.bf16.mxu0 0
    %876 = vmatmul.mubr.bf16.gmra.mrb[0].mxu0 %v715
    %v877 = vpop.f32.mrb[0].mxu0
    %v878 = vadd.f32 %v195, %v877
    %v879 = vpop.f32.mrb[0].mxu0
    %v880 = vpop.f32.mrb[0].mxu0
    %v881 = vpop.f32.mrb[0].mxu0
    %882 = vdwg.mxu0
    %v883 = vadd.f32 %v838, %v878
    %v884 = vxor.u32 %v883, 2147483648
    %v885 = vmul.f32 %v884, 1.442695
    %v886 = vpow.pop %v885
    %v887 = vadd.f32 %v886, 1.0
    %v888 = vrcp.pop %v887
    %v889 = vmul.f32 1.0, %v888
    %891 = vrot.lane.b32.xlu0 %v878, 64
    %v892 = vpop.permute.xlu0 %891
    %v894 = vmul.f32 %v889, %v892
    %896 = vrot.lane.b32.xlu0 %v894, 64
    %v897 = vpop.permute.xlu0 %896
    %v899 = vadd.f32 %v838, %v897
    %v900 = vtanh.pop %v899
    %v901 = vsub.f32 1.0, %v889
    %903 = vrot.lane.b32.xlu0 %v900, 96
    %v904 = vpop.permute.xlu0 %903
    %v906 = vmul.f32 %v901, %v904
    %v907 = vmul.f32 %v889, %v709
    %v908 = vadd.f32 %v906, %v907
    %v909 = vpack.c.bf16 %v908, %v908
    %911 = vrot.lane.b32.xlu0 %v909, 96
    %v912 = vpop.permute.xlu0 %911
    %v914 = vsel %vm142, %v912, 0
    %916 = vmatprep.subr.bf16.mxu0 0
    %917 = vmatpush1.bf16.msra.mxu0 %v306
    %918 = vmatprep.subr.bf16.mxu0 0
    %919 = vmatpush1.bf16.msra.mxu0 %v307
    %920 = vmatprep.subr.bf16.mxu0 0
    %921 = vmatpush1.bf16.msra.mxu0 0
    %922 = vmatprep.subr.bf16.mxu0 0
    %923 = vmatpush1.bf16.msra.mxu0 0
    %924 = vmatprep.subr.bf16.mxu0 0
    %925 = vmatpush1.bf16.msra.mxu0 0
    %926 = vmatprep.subr.bf16.mxu0 0
    %927 = vmatpush1.bf16.msra.mxu0 0
    %928 = vmatprep.subr.bf16.mxu0 0
    %929 = vmatpush1.bf16.msra.mxu0 0
    %930 = vmatprep.subr.bf16.mxu0 0
    %931 = vmatpush1.bf16.msra.mxu0 0
    %932 = vmatprep.subr.bf16.mxu0 0
    %933 = vmatpush1.bf16.msra.mxu0 0
    %934 = vmatprep.subr.bf16.mxu0 0
    %935 = vmatpush1.bf16.msra.mxu0 0
    %936 = vmatprep.subr.bf16.mxu0 0
    %937 = vmatpush1.bf16.msra.mxu0 0
    %938 = vmatprep.subr.bf16.mxu0 0
    %939 = vmatpush1.bf16.msra.mxu0 0
    %940 = vmatprep.subr.bf16.mxu0 0
    %941 = vmatpush1.bf16.msra.mxu0 0
    %942 = vmatprep.subr.bf16.mxu0 0
    %943 = vmatpush1.bf16.msra.mxu0 0
    %944 = vmatprep.subr.bf16.mxu0 0
    %945 = vmatpush1.bf16.msra.mxu0 0
    %946 = vmatprep.subr.bf16.mxu0 0
    %947 = vmatpush1.bf16.msra.mxu0 0
    %948 = vmatprep.mubr.bf16.mxu0 0
    %949 = vmatmul.mubr.bf16.gmra.mrb[0].mxu0 %v914
    %v950 = vpop.f32.mrb[0].mxu0
    %v951 = vadd.f32 %v293, %v950
    %v952 = vpop.f32.mrb[0].mxu0
    %v953 = vpop.f32.mrb[0].mxu0
    %v954 = vpop.f32.mrb[0].mxu0
    %955 = vdwg.mxu0
    %s956 = scalar_lea.vmem %s9, 24
    %v957 = vld [vmem:[%s956] sm:$0xff]
    %v958 = vadd.f32 %v951, %v957
    %v959 = vsel %vm355, %v958, -inf
    %960 = vmax.xlane.f32.xlu0 %v959
    %v961 = vpop.xlane.xlu0 %960
    %vm962 = vcmp.ge.f32.partialorder %v958, %v961
    %v963 = vsel %vm962, %v189, 16
    %v964 = vsel %vm355, %v963, 2147483647
    %v965 = vand.u32 %v964, 65535
    %v966 = vshra.s32 %v964, 16
    %v967 = vcvt.s32.f32 %v965
    %v968 = vcvt.s32.f32 %v966
    %969 = vmin.xlane.f32.xlu0 %v968
    %v970 = vpop.xlane.xlu0 %969
    %vm971 = vcmp.eq.f32.partialorder %v968, %v970
    %v972 = vsel %vm971, %v967, inf
    %973 = vmin.xlane.f32.xlu0 %v972
    %v974 = vpop.xlane.xlu0 %973
    %v975 = vcvt.f32.s32 %v974
    %v976 = vcvt.f32.s32 %v970
    %v977 = vshll.u32 %v976, 16
    %v978 = vadd.s32 %v977, %v975
    %vm979 = vcmp.eq.s32.totalorder %v189, %v978
    %v980 = vsel %vm979, 1, 0
    %v981 = vcvt.s32.f32 %v980
    %v982 = vsel %vm355, %v951, -inf
    %983 = vmax.xlane.f32.xlu0 %v982
    %v984 = vpop.xlane.xlu0 %983
    %v985 = vsub.f32 %v951, %v984
    %v986 = vmul.f32 %v985, 1.442695
    %v987 = vpow.pop %v986
    %v988 = vsel %vm355, %v987, 0.0
    %989 = vadd.xlane.f32.xlu0 %v988
    %v990 = vpop.xlane.xlu0 %989
    %v991 = vlog2.pop %v990
    %v992 = vmul.f32 %v991, 0.6931472
    %v993 = vsub.f32 %v985, %v992
    %v994 = vmul.f32 %v993, %v981
    %v995 = vsel %vm355, %v994, 0.0
    %996 = vadd.xlane.f32.xlu0 %v995
    %v997 = vpop.xlane.xlu0 %996
    %v998 = vpack.c.bf16 %v981, %v981
    %v1000 = vsel %vm355, %v998, 0
    %1002 = vmatprep.subr.bf16.mxu0 0
    %1003 = vmatpush1.bf16.msra.mxu0 %v400
    %1004 = vmatprep.subr.bf16.mxu0 0
    %1005 = vmatpush1.bf16.msra.mxu0 0
    %1006 = vmatprep.subr.bf16.mxu0 0
    %1007 = vmatpush1.bf16.msra.mxu0 0
    %1008 = vmatprep.subr.bf16.mxu0 0
    %1009 = vmatpush1.bf16.msra.mxu0 0
    %1010 = vmatprep.subr.bf16.mxu0 0
    %1011 = vmatpush1.bf16.msra.mxu0 0
    %1012 = vmatprep.subr.bf16.mxu0 0
    %1013 = vmatpush1.bf16.msra.mxu0 0
    %1014 = vmatprep.subr.bf16.mxu0 0
    %1015 = vmatpush1.bf16.msra.mxu0 0
    %1016 = vmatprep.subr.bf16.mxu0 0
    %1017 = vmatpush1.bf16.msra.mxu0 0
    %1018 = vmatprep.subr.bf16.mxu0 0
    %1019 = vmatpush1.bf16.msra.mxu0 0
    %1020 = vmatprep.subr.bf16.mxu0 0
    %1021 = vmatpush1.bf16.msra.mxu0 0
    %1022 = vmatprep.subr.bf16.mxu0 0
    %1023 = vmatpush1.bf16.msra.mxu0 0
    %1024 = vmatprep.subr.bf16.mxu0 0
    %1025 = vmatpush1.bf16.msra.mxu0 0
    %1026 = vmatprep.subr.bf16.mxu0 0
    %1027 = vmatpush1.bf16.msra.mxu0 0
    %1028 = vmatprep.subr.bf16.mxu0 0
    %1029 = vmatpush1.bf16.msra.mxu0 0
    %1030 = vmatprep.subr.bf16.mxu0 0
    %1031 = vmatpush1.bf16.msra.mxu0 0
    %1032 = vmatprep.subr.bf16.mxu0 0
    %1033 = vmatpush1.bf16.msra.mxu0 0
    %1034 = vmatprep.mubr.bf16.mxu0 0
    %1035 = vmatmul.mubr.bf16.gmra.mrb[0].mxu0 %v1000
    %v1036 = vpop.f32.mrb[0].mxu0
    %v1037 = vadd.f32 0.0, %v1036
    %v1038 = vpop.f32.mrb[0].mxu0
    %v1039 = vpop.f32.mrb[0].mxu0
    %v1040 = vpop.f32.mrb[0].mxu0
    %1041 = vdwg.mxu0
    %1042 = vmatprep.subr.bf16.mxu0 0
    %1043 = vmatpush1.bf16.msra.mxu0 %v205
    %1044 = vmatprep.subr.bf16.mxu0 0
    %1045 = vmatpush1.bf16.msra.mxu0 %v206
    %1046 = vmatprep.subr.bf16.mxu0 0
    %1047 = vmatpush1.bf16.msra.mxu0 0
    %1048 = vmatprep.subr.bf16.mxu0 0
    %1049 = vmatpush1.bf16.msra.mxu0 0
    %1050 = vmatprep.subr.bf16.mxu0 0
    %1051 = vmatpush1.bf16.msra.mxu0 0
    %1052 = vmatprep.subr.bf16.mxu0 0
    %1053 = vmatpush1.bf16.msra.mxu0 0
    %1054 = vmatprep.subr.bf16.mxu0 0
    %1055 = vmatpush1.bf16.msra.mxu0 0
    %1056 = vmatprep.subr.bf16.mxu0 0
    %1057 = vmatpush1.bf16.msra.mxu0 0
    %1058 = vmatprep.subr.bf16.mxu0 0
    %1059 = vmatpush1.bf16.msra.mxu0 0
    %1060 = vmatprep.subr.bf16.mxu0 0
    %1061 = vmatpush1.bf16.msra.mxu0 0
    %1062 = vmatprep.subr.bf16.mxu0 0
    %1063 = vmatpush1.bf16.msra.mxu0 0
    %1064 = vmatprep.subr.bf16.mxu0 0
    %1065 = vmatpush1.bf16.msra.mxu0 0
    %1066 = vmatprep.subr.bf16.mxu0 0
    %1067 = vmatpush1.bf16.msra.mxu0 0
    %1068 = vmatprep.subr.bf16.mxu0 0
    %1069 = vmatpush1.bf16.msra.mxu0 0
    %1070 = vmatprep.subr.bf16.mxu0 0
    %1071 = vmatpush1.bf16.msra.mxu0 0
    %1072 = vmatprep.subr.bf16.mxu0 0
    %1073 = vmatpush1.bf16.msra.mxu0 0
    %1074 = vmatprep.mubr.bf16.mxu0 0
    %1075 = vmatmul.mubr.bf16.gmra.mrb[0].mxu0 %v914
    %v1076 = vpop.f32.mrb[0].mxu0
    %v1077 = vadd.f32 %v195, %v1076
    %v1078 = vpop.f32.mrb[0].mxu0
    %v1079 = vpop.f32.mrb[0].mxu0
    %v1080 = vpop.f32.mrb[0].mxu0
    %1081 = vdwg.mxu0
    %v1082 = vadd.f32 %v1037, %v1077
    %v1083 = vxor.u32 %v1082, 2147483648
    %v1084 = vmul.f32 %v1083, 1.442695
    %v1085 = vpow.pop %v1084
    %v1086 = vadd.f32 %v1085, 1.0
    %v1087 = vrcp.pop %v1086
    %v1088 = vmul.f32 1.0, %v1087
    %1090 = vrot.lane.b32.xlu0 %v1077, 64
    %v1091 = vpop.permute.xlu0 %1090
    %v1093 = vmul.f32 %v1088, %v1091
    %1095 = vrot.lane.b32.xlu0 %v1093, 64
    %v1096 = vpop.permute.xlu0 %1095
    %v1098 = vadd.f32 %v1037, %v1096
    %v1099 = vtanh.pop %v1098
    %v1100 = vsub.f32 1.0, %v1088
    %1102 = vrot.lane.b32.xlu0 %v1099, 96
    %v1103 = vpop.permute.xlu0 %1102
    %v1105 = vmul.f32 %v1100, %v1103
    %v1106 = vmul.f32 %v1088, %v908
    %v1107 = vadd.f32 %v1105, %v1106
    %v1108 = vpack.c.bf16 %v1107, %v1107
    %1110 = vrot.lane.b32.xlu0 %v1108, 96
    %v1111 = vpop.permute.xlu0 %1110
    %v1113 = vsel %vm142, %v1111, 0
    %1115 = vmatprep.subr.bf16.mxu0 0
    %1116 = vmatpush1.bf16.msra.mxu0 %v306
    %1117 = vmatprep.subr.bf16.mxu0 0
    %1118 = vmatpush1.bf16.msra.mxu0 %v307
    %1119 = vmatprep.subr.bf16.mxu0 0
    %1120 = vmatpush1.bf16.msra.mxu0 0
    %1121 = vmatprep.subr.bf16.mxu0 0
    %1122 = vmatpush1.bf16.msra.mxu0 0
    %1123 = vmatprep.subr.bf16.mxu0 0
    %1124 = vmatpush1.bf16.msra.mxu0 0
    %1125 = vmatprep.subr.bf16.mxu0 0
    %1126 = vmatpush1.bf16.msra.mxu0 0
    %1127 = vmatprep.subr.bf16.mxu0 0
    %1128 = vmatpush1.bf16.msra.mxu0 0
    %1129 = vmatprep.subr.bf16.mxu0 0
    %1130 = vmatpush1.bf16.msra.mxu0 0
    %1131 = vmatprep.subr.bf16.mxu0 0
    %1132 = vmatpush1.bf16.msra.mxu0 0
    %1133 = vmatprep.subr.bf16.mxu0 0
    %1134 = vmatpush1.bf16.msra.mxu0 0
    %1135 = vmatprep.subr.bf16.mxu0 0
    %1136 = vmatpush1.bf16.msra.mxu0 0
    %1137 = vmatprep.subr.bf16.mxu0 0
    %1138 = vmatpush1.bf16.msra.mxu0 0
    %1139 = vmatprep.subr.bf16.mxu0 0
    %1140 = vmatpush1.bf16.msra.mxu0 0
    %1141 = vmatprep.subr.bf16.mxu0 0
    %1142 = vmatpush1.bf16.msra.mxu0 0
    %1143 = vmatprep.subr.bf16.mxu0 0
    %1144 = vmatpush1.bf16.msra.mxu0 0
    %1145 = vmatprep.subr.bf16.mxu0 0
    %1146 = vmatpush1.bf16.msra.mxu0 0
    %1147 = vmatprep.mubr.bf16.mxu0 0
    %1148 = vmatmul.mubr.bf16.gmra.mrb[0].mxu0 %v1113
    %v1149 = vpop.f32.mrb[0].mxu0
    %v1150 = vadd.f32 %v293, %v1149
    %v1151 = vpop.f32.mrb[0].mxu0
    %v1152 = vpop.f32.mrb[0].mxu0
    %v1153 = vpop.f32.mrb[0].mxu0
    %1154 = vdwg.mxu0
    %s1155 = scalar_lea.vmem %s9, 32
    %v1156 = vld [vmem:[%s1155] sm:$0xff]
    %v1157 = vadd.f32 %v1150, %v1156
    %v1158 = vsel %vm355, %v1157, -inf
    %1159 = vmax.xlane.f32.xlu0 %v1158
    %v1160 = vpop.xlane.xlu0 %1159
    %vm1161 = vcmp.ge.f32.partialorder %v1157, %v1160
    %v1162 = vsel %vm1161, %v189, 16
    %v1163 = vsel %vm355, %v1162, 2147483647
    %v1164 = vand.u32 %v1163, 65535
    %v1165 = vshra.s32 %v1163, 16
    %v1166 = vcvt.s32.f32 %v1164
    %v1167 = vcvt.s32.f32 %v1165
    %1168 = vmin.xlane.f32.xlu0 %v1167
    %v1169 = vpop.xlane.xlu0 %1168
    %vm1170 = vcmp.eq.f32.partialorder %v1167, %v1169
    %v1171 = vsel %vm1170, %v1166, inf
    %1172 = vmin.xlane.f32.xlu0 %v1171
    %v1173 = vpop.xlane.xlu0 %1172
    %v1174 = vcvt.f32.s32 %v1173
    %v1175 = vcvt.f32.s32 %v1169
    %v1176 = vshll.u32 %v1175, 16
    %v1177 = vadd.s32 %v1176, %v1174
    %vm1178 = vcmp.eq.s32.totalorder %v189, %v1177
    %v1179 = vsel %vm1178, 1, 0
    %v1180 = vcvt.s32.f32 %v1179
    %v1181 = vsel %vm355, %v1150, -inf
    %1182 = vmax.xlane.f32.xlu0 %v1181
    %v1183 = vpop.xlane.xlu0 %1182
    %v1184 = vsub.f32 %v1150, %v1183
    %v1185 = vmul.f32 %v1184, 1.442695
    %v1186 = vpow.pop %v1185
    %v1187 = vsel %vm355, %v1186, 0.0
    %1188 = vadd.xlane.f32.xlu0 %v1187
    %v1189 = vpop.xlane.xlu0 %1188
    %v1190 = vlog2.pop %v1189
    %v1191 = vmul.f32 %v1190, 0.6931472
    %v1192 = vsub.f32 %v1184, %v1191
    %v1193 = vmul.f32 %v1192, %v1180
    %v1194 = vsel %vm355, %v1193, 0.0
    %1195 = vadd.xlane.f32.xlu0 %v1194
    %v1196 = vpop.xlane.xlu0 %1195
    %v1197 = vpack.c.bf16 %v1180, %v1180
    %v1199 = vsel %vm355, %v1197, 0
    %1201 = vmatprep.subr.bf16.mxu0 0
    %1202 = vmatpush1.bf16.msra.mxu0 %v400
    %1203 = vmatprep.subr.bf16.mxu0 0
    %1204 = vmatpush1.bf16.msra.mxu0 0
    %1205 = vmatprep.subr.bf16.mxu0 0
    %1206 = vmatpush1.bf16.msra.mxu0 0
    %1207 = vmatprep.subr.bf16.mxu0 0
    %1208 = vmatpush1.bf16.msra.mxu0 0
    %1209 = vmatprep.subr.bf16.mxu0 0
    %1210 = vmatpush1.bf16.msra.mxu0 0
    %1211 = vmatprep.subr.bf16.mxu0 0
    %1212 = vmatpush1.bf16.msra.mxu0 0
    %1213 = vmatprep.subr.bf16.mxu0 0
    %1214 = vmatpush1.bf16.msra.mxu0 0
    %1215 = vmatprep.subr.bf16.mxu0 0
    %1216 = vmatpush1.bf16.msra.mxu0 0
    %1217 = vmatprep.subr.bf16.mxu0 0
    %1218 = vmatpush1.bf16.msra.mxu0 0
    %1219 = vmatprep.subr.bf16.mxu0 0
    %1220 = vmatpush1.bf16.msra.mxu0 0
    %1221 = vmatprep.subr.bf16.mxu0 0
    %1222 = vmatpush1.bf16.msra.mxu0 0
    %1223 = vmatprep.subr.bf16.mxu0 0
    %1224 = vmatpush1.bf16.msra.mxu0 0
    %1225 = vmatprep.subr.bf16.mxu0 0
    %1226 = vmatpush1.bf16.msra.mxu0 0
    %1227 = vmatprep.subr.bf16.mxu0 0
    %1228 = vmatpush1.bf16.msra.mxu0 0
    %1229 = vmatprep.subr.bf16.mxu0 0
    %1230 = vmatpush1.bf16.msra.mxu0 0
    %1231 = vmatprep.subr.bf16.mxu0 0
    %1232 = vmatpush1.bf16.msra.mxu0 0
    %1233 = vmatprep.mubr.bf16.mxu0 0
    %1234 = vmatmul.mubr.bf16.gmra.mrb[0].mxu0 %v1199
    %v1235 = vpop.f32.mrb[0].mxu0
    %v1236 = vadd.f32 0.0, %v1235
    %v1237 = vpop.f32.mrb[0].mxu0
    %v1238 = vpop.f32.mrb[0].mxu0
    %v1239 = vpop.f32.mrb[0].mxu0
    %1240 = vdwg.mxu0
    %1241 = vmatprep.subr.bf16.mxu0 0
    %1242 = vmatpush1.bf16.msra.mxu0 %v205
    %1243 = vmatprep.subr.bf16.mxu0 0
    %1244 = vmatpush1.bf16.msra.mxu0 %v206
    %1245 = vmatprep.subr.bf16.mxu0 0
    %1246 = vmatpush1.bf16.msra.mxu0 0
    %1247 = vmatprep.subr.bf16.mxu0 0
    %1248 = vmatpush1.bf16.msra.mxu0 0
    %1249 = vmatprep.subr.bf16.mxu0 0
    %1250 = vmatpush1.bf16.msra.mxu0 0
    %1251 = vmatprep.subr.bf16.mxu0 0
    %1252 = vmatpush1.bf16.msra.mxu0 0
    %1253 = vmatprep.subr.bf16.mxu0 0
    %1254 = vmatpush1.bf16.msra.mxu0 0
    %1255 = vmatprep.subr.bf16.mxu0 0
    %1256 = vmatpush1.bf16.msra.mxu0 0
    %1257 = vmatprep.subr.bf16.mxu0 0
    %1258 = vmatpush1.bf16.msra.mxu0 0
    %1259 = vmatprep.subr.bf16.mxu0 0
    %1260 = vmatpush1.bf16.msra.mxu0 0
    %1261 = vmatprep.subr.bf16.mxu0 0
    %1262 = vmatpush1.bf16.msra.mxu0 0
    %1263 = vmatprep.subr.bf16.mxu0 0
    %1264 = vmatpush1.bf16.msra.mxu0 0
    %1265 = vmatprep.subr.bf16.mxu0 0
    %1266 = vmatpush1.bf16.msra.mxu0 0
    %1267 = vmatprep.subr.bf16.mxu0 0
    %1268 = vmatpush1.bf16.msra.mxu0 0
    %1269 = vmatprep.subr.bf16.mxu0 0
    %1270 = vmatpush1.bf16.msra.mxu0 0
    %1271 = vmatprep.subr.bf16.mxu0 0
    %1272 = vmatpush1.bf16.msra.mxu0 0
    %1273 = vmatprep.mubr.bf16.mxu0 0
    %1274 = vmatmul.mubr.bf16.gmra.mrb[0].mxu0 %v1113
    %v1275 = vpop.f32.mrb[0].mxu0
    %v1276 = vadd.f32 %v195, %v1275
    %v1277 = vpop.f32.mrb[0].mxu0
    %v1278 = vpop.f32.mrb[0].mxu0
    %v1279 = vpop.f32.mrb[0].mxu0
    %1280 = vdwg.mxu0
    %v1281 = vadd.f32 %v1236, %v1276
    %v1282 = vxor.u32 %v1281, 2147483648
    %v1283 = vmul.f32 %v1282, 1.442695
    %v1284 = vpow.pop %v1283
    %v1285 = vadd.f32 %v1284, 1.0
    %v1286 = vrcp.pop %v1285
    %v1287 = vmul.f32 1.0, %v1286
    %1289 = vrot.lane.b32.xlu0 %v1276, 64
    %v1290 = vpop.permute.xlu0 %1289
    %v1292 = vmul.f32 %v1287, %v1290
    %1294 = vrot.lane.b32.xlu0 %v1292, 64
    %v1295 = vpop.permute.xlu0 %1294
    %v1297 = vadd.f32 %v1236, %v1295
    %v1298 = vtanh.pop %v1297
    %v1299 = vsub.f32 1.0, %v1287
    %1301 = vrot.lane.b32.xlu0 %v1298, 96
    %v1302 = vpop.permute.xlu0 %1301
    %v1304 = vmul.f32 %v1299, %v1302
    %v1305 = vmul.f32 %v1287, %v1107
    %v1306 = vadd.f32 %v1304, %v1305
    %v1307 = vpack.c.bf16 %v1306, %v1306
    %1309 = vrot.lane.b32.xlu0 %v1307, 96
    %v1310 = vpop.permute.xlu0 %1309
    %v1312 = vsel %vm142, %v1310, 0
    %1314 = vmatprep.subr.bf16.mxu0 0
    %1315 = vmatpush1.bf16.msra.mxu0 %v306
    %1316 = vmatprep.subr.bf16.mxu0 0
    %1317 = vmatpush1.bf16.msra.mxu0 %v307
    %1318 = vmatprep.subr.bf16.mxu0 0
    %1319 = vmatpush1.bf16.msra.mxu0 0
    %1320 = vmatprep.subr.bf16.mxu0 0
    %1321 = vmatpush1.bf16.msra.mxu0 0
    %1322 = vmatprep.subr.bf16.mxu0 0
    %1323 = vmatpush1.bf16.msra.mxu0 0
    %1324 = vmatprep.subr.bf16.mxu0 0
    %1325 = vmatpush1.bf16.msra.mxu0 0
    %1326 = vmatprep.subr.bf16.mxu0 0
    %1327 = vmatpush1.bf16.msra.mxu0 0
    %1328 = vmatprep.subr.bf16.mxu0 0
    %1329 = vmatpush1.bf16.msra.mxu0 0
    %1330 = vmatprep.subr.bf16.mxu0 0
    %1331 = vmatpush1.bf16.msra.mxu0 0
    %1332 = vmatprep.subr.bf16.mxu0 0
    %1333 = vmatpush1.bf16.msra.mxu0 0
    %1334 = vmatprep.subr.bf16.mxu0 0
    %1335 = vmatpush1.bf16.msra.mxu0 0
    %1336 = vmatprep.subr.bf16.mxu0 0
    %1337 = vmatpush1.bf16.msra.mxu0 0
    %1338 = vmatprep.subr.bf16.mxu0 0
    %1339 = vmatpush1.bf16.msra.mxu0 0
    %1340 = vmatprep.subr.bf16.mxu0 0
    %1341 = vmatpush1.bf16.msra.mxu0 0
    %1342 = vmatprep.subr.bf16.mxu0 0
    %1343 = vmatpush1.bf16.msra.mxu0 0
    %1344 = vmatprep.subr.bf16.mxu0 0
    %1345 = vmatpush1.bf16.msra.mxu0 0
    %1346 = vmatprep.mubr.bf16.mxu0 0
    %1347 = vmatmul.mubr.bf16.gmra.mrb[0].mxu0 %v1312
    %v1348 = vpop.f32.mrb[0].mxu0
    %v1349 = vadd.f32 %v293, %v1348
    %v1350 = vpop.f32.mrb[0].mxu0
    %v1351 = vpop.f32.mrb[0].mxu0
    %v1352 = vpop.f32.mrb[0].mxu0
    %1353 = vdwg.mxu0
    %s1354 = scalar_lea.vmem %s9, 40
    %v1355 = vld [vmem:[%s1354] sm:$0xff]
    %v1356 = vadd.f32 %v1349, %v1355
    %v1357 = vsel %vm355, %v1356, -inf
    %1358 = vmax.xlane.f32.xlu0 %v1357
    %v1359 = vpop.xlane.xlu0 %1358
    %vm1360 = vcmp.ge.f32.partialorder %v1356, %v1359
    %v1361 = vsel %vm1360, %v189, 16
    %v1362 = vsel %vm355, %v1361, 2147483647
    %v1363 = vand.u32 %v1362, 65535
    %v1364 = vshra.s32 %v1362, 16
    %v1365 = vcvt.s32.f32 %v1363
    %v1366 = vcvt.s32.f32 %v1364
    %1367 = vmin.xlane.f32.xlu0 %v1366
    %v1368 = vpop.xlane.xlu0 %1367
    %vm1369 = vcmp.eq.f32.partialorder %v1366, %v1368
    %v1370 = vsel %vm1369, %v1365, inf
    %1371 = vmin.xlane.f32.xlu0 %v1370
    %v1372 = vpop.xlane.xlu0 %1371
    %v1373 = vcvt.f32.s32 %v1372
    %v1374 = vcvt.f32.s32 %v1368
    %v1375 = vshll.u32 %v1374, 16
    %v1376 = vadd.s32 %v1375, %v1373
    %vm1377 = vcmp.eq.s32.totalorder %v189, %v1376
    %v1378 = vsel %vm1377, 1, 0
    %v1379 = vcvt.s32.f32 %v1378
    %v1380 = vsel %vm355, %v1349, -inf
    %1381 = vmax.xlane.f32.xlu0 %v1380
    %v1382 = vpop.xlane.xlu0 %1381
    %v1383 = vsub.f32 %v1349, %v1382
    %v1384 = vmul.f32 %v1383, 1.442695
    %v1385 = vpow.pop %v1384
    %v1386 = vsel %vm355, %v1385, 0.0
    %1387 = vadd.xlane.f32.xlu0 %v1386
    %v1388 = vpop.xlane.xlu0 %1387
    %v1389 = vlog2.pop %v1388
    %v1390 = vmul.f32 %v1389, 0.6931472
    %v1391 = vsub.f32 %v1383, %v1390
    %v1392 = vmul.f32 %v1391, %v1379
    %v1393 = vsel %vm355, %v1392, 0.0
    %1394 = vadd.xlane.f32.xlu0 %v1393
    %v1395 = vpop.xlane.xlu0 %1394
    %vm1396 = vcmask 7168
    %v1397 = vsel %vm1396, %v375, %v580
    %vm1398 = vcmask 15360
    %v1399 = vsel %vm1398, %v1397, %v779
    %vm1400 = vcmask 23552
    %v1401 = vsel %vm1400, %v1399, %v978
    %vm1402 = vcmask 31744
    %v1403 = vsel %vm1402, %v1401, %v1177
    %vm1404 = vcmask 39936
    %v1405 = vsel %vm1404, %v1403, %v1376
    %vm1406 = vcmask 48128
    %1407 = vst.msk [vmem:[#allocation11] sm:$0xff] %vm1406, %v1405
    %v1408 = vsel %vm1396, %v394, %v599
    %v1409 = vsel %vm1398, %v1408, %v798
    %v1410 = vsel %vm1400, %v1409, %v997
    %v1411 = vsel %vm1402, %v1410, %v1196
    %v1412 = vsel %vm1404, %v1411, %v1395
    %1413 = vst.msk [vmem:[#allocation12] sm:$0xff] %vm1406, %v1412
    %1415 = vrot.lane.b32.xlu0 %v595, 16
    %v1416 = vpop.permute.xlu0 %1415
    %1419 = vrot.lane.b32.xlu0 %v794, 32
    %v1420 = vpop.permute.xlu0 %1419
    %1423 = vrot.lane.b32.xlu0 %v993, 48
    %v1424 = vpop.permute.xlu0 %1423
    %1427 = vrot.lane.b32.xlu0 %v1192, 64
    %v1428 = vpop.permute.xlu0 %1427
    %1431 = vrot.lane.b32.xlu0 %v1391, 80
    %v1432 = vpop.permute.xlu0 %1431
    %v1434 = vsel %vm355, %v390, %v1416
    %v1435 = vsel %vm142, %v1434, %v1420
    %vm1436 = vcmask 392192
    %v1437 = vsel %vm1436, %v1435, %v1424
    %vm1438 = vcmask 523264
    %v1439 = vsel %vm1438, %v1437, %v1428
    %vm1440 = vcmask 654336
    %v1441 = vsel %vm1440, %v1439, %v1432
    %vm1442 = vcmask 785408
    %1443 = vst.msk [vmem:[#allocation14] sm:$0xff] %vm1442, %v1441
    // Predicated region
    $region62: #{tpu_custom_call.1} parent=1 // pred_check
      _
    $region63: #{tpu_custom_call.1} parent=1 // pred_check_branch
      %1445 = sbr.rel (0) target = $region65
    $region64: #{tpu_custom_call.1} parent=1 // pred_region
      %s1447 = ssub.s32 128, 128
      %1448 = vsyncadd [#allocation4], %s1447
      %s1450 = sshll.u32 [#allocation11], 4
      %s1451 = int_to_ptr.vmem [resolvable:$true] %s1450
      %1453 = dma.vmem_to_hbm [thread:$0]  %s1451, 128, %s10, [#allocation4]
    $region65: #{tpu_custom_call.1} parent=1 // pred_fallthru
      _
    // Predicated region
    $region66: #{tpu_custom_call.1} parent=1 // pred_check
      _
    $region67: #{tpu_custom_call.1} parent=1 // pred_check_branch
      %1455 = sbr.rel (0) target = $region69
    $region68: #{tpu_custom_call.1} parent=1 // pred_region
      %s1457 = ssub.s32 128, 128
      %1458 = vsyncadd [#allocation13], %s1457
      %s1460 = sshll.u32 [#allocation12], 4
      %s1461 = int_to_ptr.vmem [resolvable:$true] %s1460
      %1463 = dma.vmem_to_hbm [thread:$0]  %s1461, 128, %s11, [#allocation13]
    $region69: #{tpu_custom_call.1} parent=1 // pred_fallthru
      _
    // Predicated region
    $region70: #{tpu_custom_call.1} parent=1 // pred_check
      _
    $region71: #{tpu_custom_call.1} parent=1 // pred_check_branch
      %1465 = sbr.rel (0) target = $region73
    $region72: #{tpu_custom_call.1} parent=1 // pred_region
      %s1467 = ssub.s32 128, 128
      %1468 = vsyncadd [#allocation13], %s1467
      %s1470 = sshll.u32 [#allocation14], 4
      %s1471 = int_to_ptr.vmem [resolvable:$true] %s1470
      %1473 = dma.vmem_to_hbm [thread:$0]  %s1471, 128, %s12, [#allocation13]
    $region73: #{tpu_custom_call.1} parent=1 // pred_fallthru
      _
    // Predicated region
    $region74: #{tpu_custom_call.1} parent=1 // pred_check
      _
    $region75: #{tpu_custom_call.1} parent=1 // pred_check_branch
      %1475 = sbr.rel (0) target = $region77
    $region76: #{tpu_custom_call.1} parent=1 // pred_region
      %1476 = dma.done [#allocation4], 128
    $region77: #{tpu_custom_call.1} parent=1 // pred_fallthru
      _
    // Predicated region
    $region78: #{tpu_custom_call.1} parent=1 // pred_check
      _
    $region79: #{tpu_custom_call.1} parent=1 // pred_check_branch
      %1478 = sbr.rel (0) target = $region81
    $region80: #{tpu_custom_call.1} parent=1 // pred_region
      %1479 = dma.done [#allocation13], 128
    $region81: #{tpu_custom_call.1} parent=1 // pred_fallthru
      _
    // Predicated region
    $region82: #{tpu_custom_call.1} parent=1 // pred_check
      _
    $region83: #{tpu_custom_call.1} parent=1 // pred_check_branch
      %1481 = sbr.rel (0) target = $region85
    $region84: #{tpu_custom_call.1} parent=1 // pred_region
      %1482 = dma.done [#allocation13], 128
    $region85: #{tpu_custom_call.1} parent=1 // pred_fallthru
      _
    %1483 = vsyncpa [#allocation3], 1
    %1484 = vsyncpa [#allocation6], 1
    %1485 = vsyncpa [#allocation9], 1
    %1486 = vsyncpa [#allocation4], 1
    %1487 = vsyncpa [#allocation13], 1

</llo_original>
